<compile_context>
chip_gen: v5e
topology: v5e:2x2
jax: 0.10.0
libtpu: 0.0.40
codegen_flags: <defaults>
</compile_context>

<pallas_src>
import jax
import jax.numpy as jnp
from jax.experimental import pallas as pl
from jax.experimental.pallas import tpu as pltpu


MXU_DTYPE = jnp.bfloat16        # MXU operand dtype; accumulation is f32.


def _round_up(x, m):
    return ((x + m - 1) // m) * m


# ---------------------------------------------------------------------------
# Static pyramid schedule
# ---------------------------------------------------------------------------

def _pyramid_schedule(seq_len):
    """(L, Lout) per _block: ZeroPad2d((0,0,0,1)) + MaxPool2d((3,1), stride=2)."""
    sched = []
    L = seq_len
    while L > 2:
        Lout = (L - 2) // 2 + 1
        sched.append((L, Lout))
        L = Lout
    return sched, L


# ---------------------------------------------------------------------------
# Fused kernel
# ---------------------------------------------------------------------------

def _make_dpcnn_kernel(B, L0, C, PMAX, OFF):
    ROWS = B * PMAX                       # merged-batch slab height (pitch PMAX)
    sched, _ = _pyramid_schedule(L0)

    def kernel(rowid_ref, xw_ref, wr_ref, br_ref, wc_ref, bc_ref,
               fcw_ref, fcb_ref, out_ref, pad_ref, ds_ref):
        f32 = jnp.float32
        rw = rowid_ref[...]               # (ROWS, 1) int32: row index within batch block

        # One-time zeroing.  Rows [0, OFF) and [OFF+ROWS, end) of pad_ref are
        # the permanent zero margins used as conv padding; every stage only
        # ever stores pad_ref[OFF:OFF+ROWS], so they stay zero.
        pad_ref[...] = jnp.zeros(pad_ref.shape, f32)
        ds_ref[...] = jnp.zeros(ds_ref.shape, f32)

        # -------- region stage: ONE wide-K MXU dot ---------------------------
        # Operand pre-padded, pre-shifted (5 copies along lanes) and pre-cast
        # to bf16 in the wrapper.  Output columns: [region1|region3|region5|down].
        # (conv_pool's branch is overwritten in the reference forward -> skipped)
        h = jnp.dot(xw_ref[...], wr_ref[...], preferred_element_type=f32) + br_ref[...]
        # h: (ROWS, C) f32; batch b data at rows [b*PMAX, b*PMAX + L0)

        # -------- _padd_and_conv: relu -> [conv1 | conv3 | conv5 | down(pool3)]
        def padd_conv(h, L):
            # ReLU and zero every non-data row (= conv zero padding; also makes
            # the MaxPool(3,1,s=1) zero-pad match PyTorch's -inf pad, valid
            # because the input is ReLU'd >= 0).  ONE aligned slab store.
            r = jnp.where(rw < L, jnp.maximum(h, 0.0), 0.0)
            pad_ref[OFF:OFF + ROWS, :] = r
            views = [pad_ref[OFF - 2 + k: OFF - 2 + k + ROWS, :] for k in range(5)]
            pooled = jnp.maximum(jnp.maximum(views[1], views[2]), views[3])
            # Wide-K fusion: lane-concat shifts + pooled, cast once, single dot.
            xcat = jnp.concatenate(views + [pooled], axis=1).astype(MXU_DTYPE)
            return jnp.dot(xcat, wc_ref[...], preferred_element_type=f32) + bc_ref[...]

        # -------- ZeroPad2d((0,0,0,1)) + MaxPool2d((3,1), stride=2) ----------
        def downsample(h, L, Lout):
            m = jnp.where(rw < L, h, 0.0)          # row L becomes the zero pad row
            pad_ref[OFF:OFF + ROWS, :] = m
            for b in range(B):                     # 3 strided loads + 1 store per batch
                base = OFF + b * PMAX
                v0 = pad_ref[pl.ds(base + 0, Lout, stride=2), :]
                v1 = pad_ref[pl.ds(base + 1, Lout, stride=2), :]
                v2 = pad_ref[pl.ds(base + 2, Lout, stride=2), :]
                ds_ref[b * PMAX: b * PMAX + Lout, :] = \
                    jnp.maximum(jnp.maximum(v0, v1), v2)
            return ds_ref[...]                     # (ROWS, C); non-data rows masked later

        # -------- forward -----------------------------------------------------
        h = padd_conv(h, L0)
        h = padd_conv(h, L0)
        for (L, Lout) in sched:                    # static pyramid loop
            px = downsample(h, L, Lout)
            h = padd_conv(px, Lout)
            h = padd_conv(h, Lout)
            h = h + px                             # residual, in registers/VMEM

        # -------- flatten (final L == 1) + fc epilogue (fused) ----------------
        # TODO(synk): nn.Dropout(0.5) — eval-mode identity (no RNG dropout).
        feats = jnp.concatenate([h[b * PMAX: b * PMAX + 1, :] for b in range(B)],
                                axis=0)            # (B, C)
        out_ref[...] = (jnp.dot(feats.astype(MXU_DTYPE), fcw_ref[...],
                                preferred_element_type=f32) + fcb_ref[...])

    return kernel


# ---------------------------------------------------------------------------
# Parameter init (deterministic synthetic, shapes as in DPCNN.__init__)
# ---------------------------------------------------------------------------

def init_params(key, in_channel, channel_size, emb_dim, num_classes):
    c4 = channel_size // 4
    ks = jax.random.split(key, 18)
    rnd = lambda k, s: (0.1 * jax.random.normal(k, s)).astype(jnp.float32)
    return {
        "r1_w": rnd(ks[0], (c4, in_channel, 1, emb_dim)), "r1_b": rnd(ks[1], (c4,)),
        "r3_w": rnd(ks[2], (c4, in_channel, 3, emb_dim)), "r3_b": rnd(ks[3], (c4,)),
        "r5_w": rnd(ks[4], (c4, in_channel, 5, emb_dim)), "r5_b": rnd(ks[5], (c4,)),
        "rd_w": rnd(ks[6], (c4, in_channel, 1, emb_dim)), "rd_b": rnd(ks[7], (c4,)),
        "c1_w": rnd(ks[8], (c4, channel_size, 1, 1)),     "c1_b": rnd(ks[9], (c4,)),
        "c3_w": rnd(ks[10], (c4, channel_size, 3, 1)),    "c3_b": rnd(ks[11], (c4,)),
        "c5_w": rnd(ks[12], (c4, channel_size, 5, 1)),    "c5_b": rnd(ks[13], (c4,)),
        "d_w":  rnd(ks[14], (c4, channel_size, 1, 1)),    "d_b":  rnd(ks[15], (c4,)),
        "fc_w": rnd(ks[16], (num_classes, channel_size)), "fc_b": rnd(ks[17], (num_classes,)),
    }


def _pack_params(p, C, Cin, E, NOUT):
    """Pack conv weights into wide-K matrices (bf16 MXU operands)."""
    c4 = C // 4
    EE = Cin * E
    f32 = jnp.float32
    ncls = p["fc_w"].shape[0]

    # Region stage: (5*EE, C); shift slot k <-> offset d = k - 2.
    wr = jnp.zeros((5, EE, C), f32)
    wr = wr.at[2, :, 0:c4].set(p["r1_w"][:, :, 0, :].reshape(c4, EE).T)
    for kh in range(3):
        wr = wr.at[kh + 1, :, c4:2 * c4].set(p["r3_w"][:, :, kh, :].reshape(c4, EE).T)
    for kh in range(5):
        wr = wr.at[kh, :, 2 * c4:3 * c4].set(p["r5_w"][:, :, kh, :].reshape(c4, EE).T)
    wr = wr.at[2, :, 3 * c4:4 * c4].set(p["rd_w"][:, :, 0, :].reshape(c4, EE).T)
    wr = wr.reshape(5 * EE, C)
    br = jnp.concatenate([p["r1_b"], p["r3_b"], p["r5_b"], p["rd_b"]]).reshape(1, C)

    # _padd_and_conv stage: (6*C, C) — slots 0..4 shifts, slot 5 = down(pool).
    wc = jnp.zeros((6, C, C), f32)
    wc = wc.at[2, :, 0:c4].set(p["c1_w"][:, :, 0, 0].T)
    for kh in range(3):
        wc = wc.at[kh + 1, :, c4:2 * c4].set(p["c3_w"][:, :, kh, 0].T)
    for kh in range(5):
        wc = wc.at[kh, :, 2 * c4:3 * c4].set(p["c5_w"][:, :, kh, 0].T)
    wc = wc.at[5, :, 3 * c4:4 * c4].set(p["d_w"][:, :, 0, 0].T)
    wc = wc.reshape(6 * C, C)
    bc = jnp.concatenate([p["c1_b"], p["c3_b"], p["c5_b"], p["d_b"]]).reshape(1, C)

    # fc, zero-padded to a lane-dense output width NOUT (sliced in the wrapper).
    fcw = jnp.zeros((C, NOUT), f32).at[:, :ncls].set(p["fc_w"].T)
    fcb = jnp.zeros((1, NOUT), f32).at[:, :ncls].set(p["fc_b"])

    return (wr.astype(MXU_DTYPE), br, wc.astype(MXU_DTYPE), bc,
            fcw.astype(MXU_DTYPE), fcb)


# ---------------------------------------------------------------------------
# Forward (one fused pallas_call, no grid — everything VMEM-resident)
# ---------------------------------------------------------------------------

def dpcnn_forward(x, params):
    B, Cin, L0, E = x.shape
    C = params["c1_w"].shape[1]          # channel_size
    ncls = params["fc_w"].shape[0]
    EE = Cin * E

    _, L_final = _pyramid_schedule(L0)
    if L_final != 1:
        # Matches the PyTorch model: fc expects flatten dim == channel_size.
        raise ValueError(f"seq_len={L0} does not reduce to 1 (got {L_final}); "
                         "the reference DPCNN fc layer requires a final length of 1.")

    PMAX = _round_up(L0 + 4, 8)          # per-batch row pitch (8-aligned)
    ROWS = B * PMAX
    OFF = 8                              # data offset in the padded scratch (aligned stores)
    SCR_ROWS = OFF + ROWS + 8
    NOUT = _round_up(max(ncls, 128), 128)

    wr, br, wc, bc, fcw, fcb = _pack_params(params, C, Cin, E, NOUT)

    # NCHW -> (B, L, Cin*emb) with channels on the lane dim, pre-padded to the
    # per-batch pitch, then pre-build the wide-K region operand (5 shifted
    # copies concatenated along lanes) and pre-cast to bf16 — all in XLA.
    xf = jnp.transpose(x, (0, 2, 1, 3)).reshape(B, L0, EE).astype(jnp.float32)
    xpad = jnp.pad(xf, ((0, 0), (2, PMAX - L0 - 2), (0, 0))).reshape(ROWS, EE)
    xpad = jnp.pad(xpad, ((0, 4), (0, 0)))
    xw = jnp.concatenate([xpad[k:k + ROWS, :] for k in range(5)],
                         axis=1).astype(MXU_DTYPE)            # (ROWS, 5*EE)

    rowid = jnp.tile(jnp.arange(PMAX, dtype=jnp.int32), B).reshape(ROWS, 1)

    kernel = _make_dpcnn_kernel(B, L0, C, PMAX, OFF)

    args = (rowid, xw, wr, br, wc, bc, fcw, fcb)
    in_specs = [pl.BlockSpec(memory_space=pltpu.MemorySpace.VMEM) for _ in args]

    out = pl.pallas_call(
        kernel,
        out_shape=jax.ShapeDtypeStruct((B, NOUT), jnp.float32),
        in_specs=in_specs,
        out_specs=pl.BlockSpec(memory_space=pltpu.MemorySpace.VMEM),
        scratch_shapes=[
            pltpu.VMEM((SCR_ROWS, C), jnp.float32),   # padded activation slab
            pltpu.VMEM((ROWS, C), jnp.float32),       # downsample (px) buffer
        ],
    )(*args)
    return out[:, :ncls]


if __name__ == "__main__":
    in_channel, channel_size, emb_dim, num_classes = 1, 32, 16, 4
    batch, seq_len = 2, 12                     # pyramid: 12 -> 6 -> 3 -> 1

    key = jax.random.PRNGKey(0)
    kx, kp = jax.random.split(key)
    x = jax.random.normal(kx, (batch, in_channel, seq_len, emb_dim), jnp.float32)
    params = init_params(kp, in_channel, channel_size, emb_dim, num_classes)

    out = jax.jit(dpcnn_forward)(x, params)
    out = jax.block_until_ready(out)
    assert out.shape == (batch, num_classes)
    assert bool(jnp.all(jnp.isfinite(out)))
    print("KERNEL_OK")
</pallas_src>

<mosaic_0001>
module attributes {stable_mosaic.version = 11 : i64} {
  func.func @kernel(%arg0: memref<32x1xi32, #tpu.memory_space<vmem>>, %arg1: memref<32x80xbf16, #tpu.memory_space<vmem>>, %arg2: memref<80x32xbf16, #tpu.memory_space<vmem>>, %arg3: memref<1x32xf32, #tpu.memory_space<vmem>>, %arg4: memref<192x32xbf16, #tpu.memory_space<vmem>>, %arg5: memref<1x32xf32, #tpu.memory_space<vmem>>, %arg6: memref<32x128xbf16, #tpu.memory_space<vmem>>, %arg7: memref<1x128xf32, #tpu.memory_space<vmem>>, %arg8: memref<2x128xf32, #tpu.memory_space<vmem>>, %arg9: memref<48x32xf32, #tpu.memory_space<vmem>>, %arg10: memref<32x32xf32, #tpu.memory_space<vmem>>) attributes {dimension_semantics = [], scalar_prefetch = 0 : i64, scratch_operands = 2 : i64, tpu.core_type = #tpu.core_type<tc>} {
    %c0 = arith.constant 0 : index
    %c0_0 = arith.constant 0 : index
    %0 = vector.load %arg0[%c0, %c0_0] : memref<32x1xi32, #tpu.memory_space<vmem>>, vector<32x1xi32>
    %cst = arith.constant 0.000000e+00 : f32
    %1 = vector.broadcast %cst : f32 to vector<48x32xf32>
    %c0_1 = arith.constant 0 : index
    %c0_2 = arith.constant 0 : index
    %2 = vector.load %arg9[%c0_1, %c0_2] : memref<48x32xf32, #tpu.memory_space<vmem>>, vector<48x32xf32>
    tpu.vector_store %arg9[%c0_1, %c0_2], %1 {strides = array<i32>} : memref<48x32xf32, #tpu.memory_space<vmem>>, vector<48x32xf32>,
    %cst_3 = arith.constant 0.000000e+00 : f32
    %3 = vector.broadcast %cst_3 : f32 to vector<32x32xf32>
    %c0_4 = arith.constant 0 : index
    %c0_5 = arith.constant 0 : index
    %4 = vector.load %arg10[%c0_4, %c0_5] : memref<32x32xf32, #tpu.memory_space<vmem>>, vector<32x32xf32>
    tpu.vector_store %arg10[%c0_4, %c0_5], %3 {strides = array<i32>} : memref<32x32xf32, #tpu.memory_space<vmem>>, vector<32x32xf32>,
    %c0_6 = arith.constant 0 : index
    %c0_7 = arith.constant 0 : index
    %5 = vector.load %arg1[%c0_6, %c0_7] : memref<32x80xbf16, #tpu.memory_space<vmem>>, vector<32x80xbf16>
    %c0_8 = arith.constant 0 : index
    %c0_9 = arith.constant 0 : index
    %6 = vector.load %arg2[%c0_8, %c0_9] : memref<80x32xbf16, #tpu.memory_space<vmem>>, vector<80x32xbf16>
    %cst_10 = arith.constant dense<0.000000e+00> : vector<32x32xf32>
    %7 = tpu.matmul %5, %6, %cst_10 {dimension_numbers = #tpu.dot_dimension_numbers<[1], [0], [0], [1], [0, 0, 1, 1], [], []>} : vector<32x80xbf16>, vector<80x32xbf16>, vector<32x32xf32> -> vector<32x32xf32>
    %c0_11 = arith.constant 0 : index
    %c0_12 = arith.constant 0 : index
    %8 = vector.load %arg3[%c0_11, %c0_12] : memref<1x32xf32, #tpu.memory_space<vmem>>, vector<1x32xf32>
    %9 = vector.broadcast %8 : vector<1x32xf32> to vector<32x32xf32>
    %10 = arith.addf %7, %9 : vector<32x32xf32>
    %c12_i32 = arith.constant 12 : i32
    %11 = vector.broadcast %c12_i32 : i32 to vector<32x1xi32>
    %12 = arith.cmpi slt, %0, %11 : vector<32x1xi32>
    %cst_13 = arith.constant 0.000000e+00 : f32
    %13 = vector.broadcast %cst_13 : f32 to vector<32x32xf32>
    %14 = arith.maximumf %10, %13 : vector<32x32xf32>
    %cst_14 = arith.constant 0.000000e+00 : f32
    %15 = vector.shape_cast %12 : vector<32x1xi1> to vector<32x1xi1>
    %16 = vector.broadcast %15 : vector<32x1xi1> to vector<32x32xi1>
    %17 = vector.broadcast %cst_14 : f32 to vector<32x32xf32>
    %18 = arith.select %16, %14, %17 : vector<32x32xi1>, vector<32x32xf32>
    %c8 = arith.constant 8 : index
    %c0_15 = arith.constant 0 : index
    %19 = vector.load %arg9[%c8, %c0_15] : memref<48x32xf32, #tpu.memory_space<vmem>>, vector<32x32xf32>
    tpu.vector_store %arg9[%c8, %c0_15], %18 {strides = array<i32>} : memref<48x32xf32, #tpu.memory_space<vmem>>, vector<32x32xf32>,
    %c6 = arith.constant 6 : index
    %c0_16 = arith.constant 0 : index
    %20 = vector.load %arg9[%c6, %c0_16] : memref<48x32xf32, #tpu.memory_space<vmem>>, vector<32x32xf32>
    %c7 = arith.constant 7 : index
    %c0_17 = arith.constant 0 : index
    %21 = vector.load %arg9[%c7, %c0_17] : memref<48x32xf32, #tpu.memory_space<vmem>>, vector<32x32xf32>
    %c8_18 = arith.constant 8 : index
    %c0_19 = arith.constant 0 : index
    %22 = vector.load %arg9[%c8_18, %c0_19] : memref<48x32xf32, #tpu.memory_space<vmem>>, vector<32x32xf32>
    %c9 = arith.constant 9 : index
    %c0_20 = arith.constant 0 : index
    %23 = vector.load %arg9[%c9, %c0_20] : memref<48x32xf32, #tpu.memory_space<vmem>>, vector<32x32xf32>
    %c10 = arith.constant 10 : index
    %c0_21 = arith.constant 0 : index
    %24 = vector.load %arg9[%c10, %c0_21] : memref<48x32xf32, #tpu.memory_space<vmem>>, vector<32x32xf32>
    %25 = arith.maximumf %21, %22 : vector<32x32xf32>
    %26 = arith.maximumf %25, %23 : vector<32x32xf32>
    %27 = tpu.concatenate %20, %21, %22, %23, %24, %26 in 1 : vector<32x32xf32>, vector<32x32xf32>, vector<32x32xf32>, vector<32x32xf32>, vector<32x32xf32>, vector<32x32xf32> -> vector<32x192xf32>
    %28 = arith.truncf %27 : vector<32x192xf32> to vector<32x192xbf16>
    %c0_22 = arith.constant 0 : index
    %c0_23 = arith.constant 0 : index
    %29 = vector.load %arg4[%c0_22, %c0_23] : memref<192x32xbf16, #tpu.memory_space<vmem>>, vector<192x32xbf16>
    %cst_24 = arith.constant dense<0.000000e+00> : vector<32x32xf32>
    %30 = tpu.matmul %28, %29, %cst_24 {dimension_numbers = #tpu.dot_dimension_numbers<[1], [0], [0], [1], [0, 0, 1, 1], [], []>} : vector<32x192xbf16>, vector<192x32xbf16>, vector<32x32xf32> -> vector<32x32xf32>
    %c0_25 = arith.constant 0 : index
    %c0_26 = arith.constant 0 : index
    %31 = vector.load %arg5[%c0_25, %c0_26] : memref<1x32xf32, #tpu.memory_space<vmem>>, vector<1x32xf32>
    %32 = vector.broadcast %31 : vector<1x32xf32> to vector<32x32xf32>
    %33 = arith.addf %30, %32 : vector<32x32xf32>
    %c12_i32_27 = arith.constant 12 : i32
    %34 = vector.broadcast %c12_i32_27 : i32 to vector<32x1xi32>
    %35 = arith.cmpi slt, %0, %34 : vector<32x1xi32>
    %cst_28 = arith.constant 0.000000e+00 : f32
    %36 = vector.broadcast %cst_28 : f32 to vector<32x32xf32>
    %37 = arith.maximumf %33, %36 : vector<32x32xf32>
    %cst_29 = arith.constant 0.000000e+00 : f32
    %38 = vector.shape_cast %35 : vector<32x1xi1> to vector<32x1xi1>
    %39 = vector.broadcast %38 : vector<32x1xi1> to vector<32x32xi1>
    %40 = vector.broadcast %cst_29 : f32 to vector<32x32xf32>
    %41 = arith.select %39, %37, %40 : vector<32x32xi1>, vector<32x32xf32>
    %c8_30 = arith.constant 8 : index
    %c0_31 = arith.constant 0 : index
    %42 = vector.load %arg9[%c8_30, %c0_31] : memref<48x32xf32, #tpu.memory_space<vmem>>, vector<32x32xf32>
    tpu.vector_store %arg9[%c8_30, %c0_31], %41 {strides = array<i32>} : memref<48x32xf32, #tpu.memory_space<vmem>>, vector<32x32xf32>,
    %c6_32 = arith.constant 6 : index
    %c0_33 = arith.constant 0 : index
    %43 = vector.load %arg9[%c6_32, %c0_33] : memref<48x32xf32, #tpu.memory_space<vmem>>, vector<32x32xf32>
    %c7_34 = arith.constant 7 : index
    %c0_35 = arith.constant 0 : index
    %44 = vector.load %arg9[%c7_34, %c0_35] : memref<48x32xf32, #tpu.memory_space<vmem>>, vector<32x32xf32>
    %c8_36 = arith.constant 8 : index
    %c0_37 = arith.constant 0 : index
    %45 = vector.load %arg9[%c8_36, %c0_37] : memref<48x32xf32, #tpu.memory_space<vmem>>, vector<32x32xf32>
    %c9_38 = arith.constant 9 : index
    %c0_39 = arith.constant 0 : index
    %46 = vector.load %arg9[%c9_38, %c0_39] : memref<48x32xf32, #tpu.memory_space<vmem>>, vector<32x32xf32>
    %c10_40 = arith.constant 10 : index
    %c0_41 = arith.constant 0 : index
    %47 = vector.load %arg9[%c10_40, %c0_41] : memref<48x32xf32, #tpu.memory_space<vmem>>, vector<32x32xf32>
    %48 = arith.maximumf %44, %45 : vector<32x32xf32>
    %49 = arith.maximumf %48, %46 : vector<32x32xf32>
    %50 = tpu.concatenate %43, %44, %45, %46, %47, %49 in 1 : vector<32x32xf32>, vector<32x32xf32>, vector<32x32xf32>, vector<32x32xf32>, vector<32x32xf32>, vector<32x32xf32> -> vector<32x192xf32>
    %51 = arith.truncf %50 : vector<32x192xf32> to vector<32x192xbf16>
    %c0_42 = arith.constant 0 : index
    %c0_43 = arith.constant 0 : index
    %52 = vector.load %arg4[%c0_42, %c0_43] : memref<192x32xbf16, #tpu.memory_space<vmem>>, vector<192x32xbf16>
    %cst_44 = arith.constant dense<0.000000e+00> : vector<32x32xf32>
    %53 = tpu.matmul %51, %52, %cst_44 {dimension_numbers = #tpu.dot_dimension_numbers<[1], [0], [0], [1], [0, 0, 1, 1], [], []>} : vector<32x192xbf16>, vector<192x32xbf16>, vector<32x32xf32> -> vector<32x32xf32>
    %c0_45 = arith.constant 0 : index
    %c0_46 = arith.constant 0 : index
    %54 = vector.load %arg5[%c0_45, %c0_46] : memref<1x32xf32, #tpu.memory_space<vmem>>, vector<1x32xf32>
    %55 = vector.broadcast %54 : vector<1x32xf32> to vector<32x32xf32>
    %56 = arith.addf %53, %55 : vector<32x32xf32>
    %c12_i32_47 = arith.constant 12 : i32
    %57 = vector.broadcast %c12_i32_47 : i32 to vector<32x1xi32>
    %58 = arith.cmpi slt, %0, %57 : vector<32x1xi32>
    %cst_48 = arith.constant 0.000000e+00 : f32
    %59 = vector.shape_cast %58 : vector<32x1xi1> to vector<32x1xi1>
    %60 = vector.broadcast %59 : vector<32x1xi1> to vector<32x32xi1>
    %61 = vector.broadcast %cst_48 : f32 to vector<32x32xf32>
    %62 = arith.select %60, %56, %61 : vector<32x32xi1>, vector<32x32xf32>
    %c8_49 = arith.constant 8 : index
    %c0_50 = arith.constant 0 : index
    %63 = vector.load %arg9[%c8_49, %c0_50] : memref<48x32xf32, #tpu.memory_space<vmem>>, vector<32x32xf32>
    tpu.vector_store %arg9[%c8_49, %c0_50], %62 {strides = array<i32>} : memref<48x32xf32, #tpu.memory_space<vmem>>, vector<32x32xf32>,
    %c8_51 = arith.constant 8 : index
    %c0_52 = arith.constant 0 : index
    %64 = tpu.strided_load %arg9[%c8_51, %c0_52] {strides = array<i32: 2, 1>} : memref<48x32xf32, #tpu.memory_space<vmem>>, vector<6x32xf32>
    %c9_53 = arith.constant 9 : index
    %c0_54 = arith.constant 0 : index
    %65 = tpu.strided_load %arg9[%c9_53, %c0_54] {strides = array<i32: 2, 1>} : memref<48x32xf32, #tpu.memory_space<vmem>>, vector<6x32xf32>
    %c10_55 = arith.constant 10 : index
    %c0_56 = arith.constant 0 : index
    %66 = tpu.strided_load %arg9[%c10_55, %c0_56] {strides = array<i32: 2, 1>} : memref<48x32xf32, #tpu.memory_space<vmem>>, vector<6x32xf32>
    %67 = arith.maximumf %64, %65 : vector<6x32xf32>
    %68 = arith.maximumf %67, %66 : vector<6x32xf32>
    %c0_57 = arith.constant 0 : index
    %c0_58 = arith.constant 0 : index
    %69 = vector.load %arg10[%c0_57, %c0_58] : memref<32x32xf32, #tpu.memory_space<vmem>>, vector<6x32xf32>
    tpu.vector_store %arg10[%c0_57, %c0_58], %68 {strides = array<i32>} : memref<32x32xf32, #tpu.memory_space<vmem>>, vector<6x32xf32>,
    %c24 = arith.constant 24 : index
    %c0_59 = arith.constant 0 : index
    %70 = tpu.strided_load %arg9[%c24, %c0_59] {strides = array<i32: 2, 1>} : memref<48x32xf32, #tpu.memory_space<vmem>>, vector<6x32xf32>
    %c25 = arith.constant 25 : index
    %c0_60 = arith.constant 0 : index
    %71 = tpu.strided_load %arg9[%c25, %c0_60] {strides = array<i32: 2, 1>} : memref<48x32xf32, #tpu.memory_space<vmem>>, vector<6x32xf32>
    %c26 = arith.constant 26 : index
    %c0_61 = arith.constant 0 : index
    %72 = tpu.strided_load %arg9[%c26, %c0_61] {strides = array<i32: 2, 1>} : memref<48x32xf32, #tpu.memory_space<vmem>>, vector<6x32xf32>
    %73 = arith.maximumf %70, %71 : vector<6x32xf32>
    %74 = arith.maximumf %73, %72 : vector<6x32xf32>
    %c16 = arith.constant 16 : index
    %c0_62 = arith.constant 0 : index
    %75 = vector.load %arg10[%c16, %c0_62] : memref<32x32xf32, #tpu.memory_space<vmem>>, vector<6x32xf32>
    tpu.vector_store %arg10[%c16, %c0_62], %74 {strides = array<i32>} : memref<32x32xf32, #tpu.memory_space<vmem>>, vector<6x32xf32>,
    %c0_63 = arith.constant 0 : index
    %c0_64 = arith.constant 0 : index
    %76 = vector.load %arg10[%c0_63, %c0_64] : memref<32x32xf32, #tpu.memory_space<vmem>>, vector<32x32xf32>
    %c6_i32 = arith.constant 6 : i32
    %77 = vector.broadcast %c6_i32 : i32 to vector<32x1xi32>
    %78 = arith.cmpi slt, %0, %77 : vector<32x1xi32>
    %cst_65 = arith.constant 0.000000e+00 : f32
    %79 = vector.broadcast %cst_65 : f32 to vector<32x32xf32>
    %80 = arith.maximumf %76, %79 : vector<32x32xf32>
    %cst_66 = arith.constant 0.000000e+00 : f32
    %81 = vector.shape_cast %78 : vector<32x1xi1> to vector<32x1xi1>
    %82 = vector.broadcast %81 : vector<32x1xi1> to vector<32x32xi1>
    %83 = vector.broadcast %cst_66 : f32 to vector<32x32xf32>
    %84 = arith.select %82, %80, %83 : vector<32x32xi1>, vector<32x32xf32>
    %c8_67 = arith.constant 8 : index
    %c0_68 = arith.constant 0 : index
    %85 = vector.load %arg9[%c8_67, %c0_68] : memref<48x32xf32, #tpu.memory_space<vmem>>, vector<32x32xf32>
    tpu.vector_store %arg9[%c8_67, %c0_68], %84 {strides = array<i32>} : memref<48x32xf32, #tpu.memory_space<vmem>>, vector<32x32xf32>,
    %c6_69 = arith.constant 6 : index
    %c0_70 = arith.constant 0 : index
    %86 = vector.load %arg9[%c6_69, %c0_70] : memref<48x32xf32, #tpu.memory_space<vmem>>, vector<32x32xf32>
    %c7_71 = arith.constant 7 : index
    %c0_72 = arith.constant 0 : index
    %87 = vector.load %arg9[%c7_71, %c0_72] : memref<48x32xf32, #tpu.memory_space<vmem>>, vector<32x32xf32>
    %c8_73 = arith.constant 8 : index
    %c0_74 = arith.constant 0 : index
    %88 = vector.load %arg9[%c8_73, %c0_74] : memref<48x32xf32, #tpu.memory_space<vmem>>, vector<32x32xf32>
    %c9_75 = arith.constant 9 : index
    %c0_76 = arith.constant 0 : index
    %89 = vector.load %arg9[%c9_75, %c0_76] : memref<48x32xf32, #tpu.memory_space<vmem>>, vector<32x32xf32>
    %c10_77 = arith.constant 10 : index
    %c0_78 = arith.constant 0 : index
    %90 = vector.load %arg9[%c10_77, %c0_78] : memref<48x32xf32, #tpu.memory_space<vmem>>, vector<32x32xf32>
    %91 = arith.maximumf %87, %88 : vector<32x32xf32>
    %92 = arith.maximumf %91, %89 : vector<32x32xf32>
    %93 = tpu.concatenate %86, %87, %88, %89, %90, %92 in 1 : vector<32x32xf32>, vector<32x32xf32>, vector<32x32xf32>, vector<32x32xf32>, vector<32x32xf32>, vector<32x32xf32> -> vector<32x192xf32>
    %94 = arith.truncf %93 : vector<32x192xf32> to vector<32x192xbf16>
    %c0_79 = arith.constant 0 : index
    %c0_80 = arith.constant 0 : index
    %95 = vector.load %arg4[%c0_79, %c0_80] : memref<192x32xbf16, #tpu.memory_space<vmem>>, vector<192x32xbf16>
    %cst_81 = arith.constant dense<0.000000e+00> : vector<32x32xf32>
    %96 = tpu.matmul %94, %95, %cst_81 {dimension_numbers = #tpu.dot_dimension_numbers<[1], [0], [0], [1], [0, 0, 1, 1], [], []>} : vector<32x192xbf16>, vector<192x32xbf16>, vector<32x32xf32> -> vector<32x32xf32>
    %c0_82 = arith.constant 0 : index
    %c0_83 = arith.constant 0 : index
    %97 = vector.load %arg5[%c0_82, %c0_83] : memref<1x32xf32, #tpu.memory_space<vmem>>, vector<1x32xf32>
    %98 = vector.broadcast %97 : vector<1x32xf32> to vector<32x32xf32>
    %99 = arith.addf %96, %98 : vector<32x32xf32>
    %c6_i32_84 = arith.constant 6 : i32
    %100 = vector.broadcast %c6_i32_84 : i32 to vector<32x1xi32>
    %101 = arith.cmpi slt, %0, %100 : vector<32x1xi32>
    %cst_85 = arith.constant 0.000000e+00 : f32
    %102 = vector.broadcast %cst_85 : f32 to vector<32x32xf32>
    %103 = arith.maximumf %99, %102 : vector<32x32xf32>
    %cst_86 = arith.constant 0.000000e+00 : f32
    %104 = vector.shape_cast %101 : vector<32x1xi1> to vector<32x1xi1>
    %105 = vector.broadcast %104 : vector<32x1xi1> to vector<32x32xi1>
    %106 = vector.broadcast %cst_86 : f32 to vector<32x32xf32>
    %107 = arith.select %105, %103, %106 : vector<32x32xi1>, vector<32x32xf32>
    %c8_87 = arith.constant 8 : index
    %c0_88 = arith.constant 0 : index
    %108 = vector.load %arg9[%c8_87, %c0_88] : memref<48x32xf32, #tpu.memory_space<vmem>>, vector<32x32xf32>
    tpu.vector_store %arg9[%c8_87, %c0_88], %107 {strides = array<i32>} : memref<48x32xf32, #tpu.memory_space<vmem>>, vector<32x32xf32>,
    %c6_89 = arith.constant 6 : index
    %c0_90 = arith.constant 0 : index
    %109 = vector.load %arg9[%c6_89, %c0_90] : memref<48x32xf32, #tpu.memory_space<vmem>>, vector<32x32xf32>
    %c7_91 = arith.constant 7 : index
    %c0_92 = arith.constant 0 : index
    %110 = vector.load %arg9[%c7_91, %c0_92] : memref<48x32xf32, #tpu.memory_space<vmem>>, vector<32x32xf32>
    %c8_93 = arith.constant 8 : index
    %c0_94 = arith.constant 0 : index
    %111 = vector.load %arg9[%c8_93, %c0_94] : memref<48x32xf32, #tpu.memory_space<vmem>>, vector<32x32xf32>
    %c9_95 = arith.constant 9 : index
    %c0_96 = arith.constant 0 : index
    %112 = vector.load %arg9[%c9_95, %c0_96] : memref<48x32xf32, #tpu.memory_space<vmem>>, vector<32x32xf32>
    %c10_97 = arith.constant 10 : index
    %c0_98 = arith.constant 0 : index
    %113 = vector.load %arg9[%c10_97, %c0_98] : memref<48x32xf32, #tpu.memory_space<vmem>>, vector<32x32xf32>
    %114 = arith.maximumf %110, %111 : vector<32x32xf32>
    %115 = arith.maximumf %114, %112 : vector<32x32xf32>
    %116 = tpu.concatenate %109, %110, %111, %112, %113, %115 in 1 : vector<32x32xf32>, vector<32x32xf32>, vector<32x32xf32>, vector<32x32xf32>, vector<32x32xf32>, vector<32x32xf32> -> vector<32x192xf32>
    %117 = arith.truncf %116 : vector<32x192xf32> to vector<32x192xbf16>
    %c0_99 = arith.constant 0 : index
    %c0_100 = arith.constant 0 : index
    %118 = vector.load %arg4[%c0_99, %c0_100] : memref<192x32xbf16, #tpu.memory_space<vmem>>, vector<192x32xbf16>
    %cst_101 = arith.constant dense<0.000000e+00> : vector<32x32xf32>
    %119 = tpu.matmul %117, %118, %cst_101 {dimension_numbers = #tpu.dot_dimension_numbers<[1], [0], [0], [1], [0, 0, 1, 1], [], []>} : vector<32x192xbf16>, vector<192x32xbf16>, vector<32x32xf32> -> vector<32x32xf32>
    %c0_102 = arith.constant 0 : index
    %c0_103 = arith.constant 0 : index
    %120 = vector.load %arg5[%c0_102, %c0_103] : memref<1x32xf32, #tpu.memory_space<vmem>>, vector<1x32xf32>
    %121 = vector.broadcast %120 : vector<1x32xf32> to vector<32x32xf32>
    %122 = arith.addf %119, %121 : vector<32x32xf32>
    %123 = arith.addf %122, %76 : vector<32x32xf32>
    %c6_i32_104 = arith.constant 6 : i32
    %124 = vector.broadcast %c6_i32_104 : i32 to vector<32x1xi32>
    %125 = arith.cmpi slt, %0, %124 : vector<32x1xi32>
    %cst_105 = arith.constant 0.000000e+00 : f32
    %126 = vector.shape_cast %125 : vector<32x1xi1> to vector<32x1xi1>
    %127 = vector.broadcast %126 : vector<32x1xi1> to vector<32x32xi1>
    %128 = vector.broadcast %cst_105 : f32 to vector<32x32xf32>
    %129 = arith.select %127, %123, %128 : vector<32x32xi1>, vector<32x32xf32>
    %c8_106 = arith.constant 8 : index
    %c0_107 = arith.constant 0 : index
    %130 = vector.load %arg9[%c8_106, %c0_107] : memref<48x32xf32, #tpu.memory_space<vmem>>, vector<32x32xf32>
    tpu.vector_store %arg9[%c8_106, %c0_107], %129 {strides = array<i32>} : memref<48x32xf32, #tpu.memory_space<vmem>>, vector<32x32xf32>,
    %c8_108 = arith.constant 8 : index
    %c0_109 = arith.constant 0 : index
    %131 = tpu.strided_load %arg9[%c8_108, %c0_109] {strides = array<i32: 2, 1>} : memref<48x32xf32, #tpu.memory_space<vmem>>, vector<3x32xf32>
    %c9_110 = arith.constant 9 : index
    %c0_111 = arith.constant 0 : index
    %132 = tpu.strided_load %arg9[%c9_110, %c0_111] {strides = array<i32: 2, 1>} : memref<48x32xf32, #tpu.memory_space<vmem>>, vector<3x32xf32>
    %c10_112 = arith.constant 10 : index
    %c0_113 = arith.constant 0 : index
    %133 = tpu.strided_load %arg9[%c10_112, %c0_113] {strides = array<i32: 2, 1>} : memref<48x32xf32, #tpu.memory_space<vmem>>, vector<3x32xf32>
    %134 = arith.maximumf %131, %132 : vector<3x32xf32>
    %135 = arith.maximumf %134, %133 : vector<3x32xf32>
    %c0_114 = arith.constant 0 : index
    %c0_115 = arith.constant 0 : index
    %136 = vector.load %arg10[%c0_114, %c0_115] : memref<32x32xf32, #tpu.memory_space<vmem>>, vector<3x32xf32>
    tpu.vector_store %arg10[%c0_114, %c0_115], %135 {strides = array<i32>} : memref<32x32xf32, #tpu.memory_space<vmem>>, vector<3x32xf32>,
    %c24_116 = arith.constant 24 : index
    %c0_117 = arith.constant 0 : index
    %137 = tpu.strided_load %arg9[%c24_116, %c0_117] {strides = array<i32: 2, 1>} : memref<48x32xf32, #tpu.memory_space<vmem>>, vector<3x32xf32>
    %c25_118 = arith.constant 25 : index
    %c0_119 = arith.constant 0 : index
    %138 = tpu.strided_load %arg9[%c25_118, %c0_119] {strides = array<i32: 2, 1>} : memref<48x32xf32, #tpu.memory_space<vmem>>, vector<3x32xf32>
    %c26_120 = arith.constant 26 : index
    %c0_121 = arith.constant 0 : index
    %139 = tpu.strided_load %arg9[%c26_120, %c0_121] {strides = array<i32: 2, 1>} : memref<48x32xf32, #tpu.memory_space<vmem>>, vector<3x32xf32>
    %140 = arith.maximumf %137, %138 : vector<3x32xf32>
    %141 = arith.maximumf %140, %139 : vector<3x32xf32>
    %c16_122 = arith.constant 16 : index
    %c0_123 = arith.constant 0 : index
    %142 = vector.load %arg10[%c16_122, %c0_123] : memref<32x32xf32, #tpu.memory_space<vmem>>, vector<3x32xf32>
    tpu.vector_store %arg10[%c16_122, %c0_123], %141 {strides = array<i32>} : memref<32x32xf32, #tpu.memory_space<vmem>>, vector<3x32xf32>,
    %c0_124 = arith.constant 0 : index
    %c0_125 = arith.constant 0 : index
    %143 = vector.load %arg10[%c0_124, %c0_125] : memref<32x32xf32, #tpu.memory_space<vmem>>, vector<32x32xf32>
    %c3_i32 = arith.constant 3 : i32
    %144 = vector.broadcast %c3_i32 : i32 to vector<32x1xi32>
    %145 = arith.cmpi slt, %0, %144 : vector<32x1xi32>
    %cst_126 = arith.constant 0.000000e+00 : f32
    %146 = vector.broadcast %cst_126 : f32 to vector<32x32xf32>
    %147 = arith.maximumf %143, %146 : vector<32x32xf32>
    %cst_127 = arith.constant 0.000000e+00 : f32
    %148 = vector.shape_cast %145 : vector<32x1xi1> to vector<32x1xi1>
    %149 = vector.broadcast %148 : vector<32x1xi1> to vector<32x32xi1>
    %150 = vector.broadcast %cst_127 : f32 to vector<32x32xf32>
    %151 = arith.select %149, %147, %150 : vector<32x32xi1>, vector<32x32xf32>
    %c8_128 = arith.constant 8 : index
    %c0_129 = arith.constant 0 : index
    %152 = vector.load %arg9[%c8_128, %c0_129] : memref<48x32xf32, #tpu.memory_space<vmem>>, vector<32x32xf32>
    tpu.vector_store %arg9[%c8_128, %c0_129], %151 {strides = array<i32>} : memref<48x32xf32, #tpu.memory_space<vmem>>, vector<32x32xf32>,
    %c6_130 = arith.constant 6 : index
    %c0_131 = arith.constant 0 : index
    %153 = vector.load %arg9[%c6_130, %c0_131] : memref<48x32xf32, #tpu.memory_space<vmem>>, vector<32x32xf32>
    %c7_132 = arith.constant 7 : index
    %c0_133 = arith.constant 0 : index
    %154 = vector.load %arg9[%c7_132, %c0_133] : memref<48x32xf32, #tpu.memory_space<vmem>>, vector<32x32xf32>
    %c8_134 = arith.constant 8 : index
    %c0_135 = arith.constant 0 : index
    %155 = vector.load %arg9[%c8_134, %c0_135] : memref<48x32xf32, #tpu.memory_space<vmem>>, vector<32x32xf32>
    %c9_136 = arith.constant 9 : index
    %c0_137 = arith.constant 0 : index
    %156 = vector.load %arg9[%c9_136, %c0_137] : memref<48x32xf32, #tpu.memory_space<vmem>>, vector<32x32xf32>
    %c10_138 = arith.constant 10 : index
    %c0_139 = arith.constant 0 : index
    %157 = vector.load %arg9[%c10_138, %c0_139] : memref<48x32xf32, #tpu.memory_space<vmem>>, vector<32x32xf32>
    %158 = arith.maximumf %154, %155 : vector<32x32xf32>
    %159 = arith.maximumf %158, %156 : vector<32x32xf32>
    %160 = tpu.concatenate %153, %154, %155, %156, %157, %159 in 1 : vector<32x32xf32>, vector<32x32xf32>, vector<32x32xf32>, vector<32x32xf32>, vector<32x32xf32>, vector<32x32xf32> -> vector<32x192xf32>
    %161 = arith.truncf %160 : vector<32x192xf32> to vector<32x192xbf16>
    %c0_140 = arith.constant 0 : index
    %c0_141 = arith.constant 0 : index
    %162 = vector.load %arg4[%c0_140, %c0_141] : memref<192x32xbf16, #tpu.memory_space<vmem>>, vector<192x32xbf16>
    %cst_142 = arith.constant dense<0.000000e+00> : vector<32x32xf32>
    %163 = tpu.matmul %161, %162, %cst_142 {dimension_numbers = #tpu.dot_dimension_numbers<[1], [0], [0], [1], [0, 0, 1, 1], [], []>} : vector<32x192xbf16>, vector<192x32xbf16>, vector<32x32xf32> -> vector<32x32xf32>
    %c0_143 = arith.constant 0 : index
    %c0_144 = arith.constant 0 : index
    %164 = vector.load %arg5[%c0_143, %c0_144] : memref<1x32xf32, #tpu.memory_space<vmem>>, vector<1x32xf32>
    %165 = vector.broadcast %164 : vector<1x32xf32> to vector<32x32xf32>
    %166 = arith.addf %163, %165 : vector<32x32xf32>
    %c3_i32_145 = arith.constant 3 : i32
    %167 = vector.broadcast %c3_i32_145 : i32 to vector<32x1xi32>
    %168 = arith.cmpi slt, %0, %167 : vector<32x1xi32>
    %cst_146 = arith.constant 0.000000e+00 : f32
    %169 = vector.broadcast %cst_146 : f32 to vector<32x32xf32>
    %170 = arith.maximumf %166, %169 : vector<32x32xf32>
    %cst_147 = arith.constant 0.000000e+00 : f32
    %171 = vector.shape_cast %168 : vector<32x1xi1> to vector<32x1xi1>
    %172 = vector.broadcast %171 : vector<32x1xi1> to vector<32x32xi1>
    %173 = vector.broadcast %cst_147 : f32 to vector<32x32xf32>
    %174 = arith.select %172, %170, %173 : vector<32x32xi1>, vector<32x32xf32>
    %c8_148 = arith.constant 8 : index
    %c0_149 = arith.constant 0 : index
    %175 = vector.load %arg9[%c8_148, %c0_149] : memref<48x32xf32, #tpu.memory_space<vmem>>, vector<32x32xf32>
    tpu.vector_store %arg9[%c8_148, %c0_149], %174 {strides = array<i32>} : memref<48x32xf32, #tpu.memory_space<vmem>>, vector<32x32xf32>,
    %c6_150 = arith.constant 6 : index
    %c0_151 = arith.constant 0 : index
    %176 = vector.load %arg9[%c6_150, %c0_151] : memref<48x32xf32, #tpu.memory_space<vmem>>, vector<32x32xf32>
    %c7_152 = arith.constant 7 : index
    %c0_153 = arith.constant 0 : index
    %177 = vector.load %arg9[%c7_152, %c0_153] : memref<48x32xf32, #tpu.memory_space<vmem>>, vector<32x32xf32>
    %c8_154 = arith.constant 8 : index
    %c0_155 = arith.constant 0 : index
    %178 = vector.load %arg9[%c8_154, %c0_155] : memref<48x32xf32, #tpu.memory_space<vmem>>, vector<32x32xf32>
    %c9_156 = arith.constant 9 : index
    %c0_157 = arith.constant 0 : index
    %179 = vector.load %arg9[%c9_156, %c0_157] : memref<48x32xf32, #tpu.memory_space<vmem>>, vector<32x32xf32>
    %c10_158 = arith.constant 10 : index
    %c0_159 = arith.constant 0 : index
    %180 = vector.load %arg9[%c10_158, %c0_159] : memref<48x32xf32, #tpu.memory_space<vmem>>, vector<32x32xf32>
    %181 = arith.maximumf %177, %178 : vector<32x32xf32>
    %182 = arith.maximumf %181, %179 : vector<32x32xf32>
    %183 = tpu.concatenate %176, %177, %178, %179, %180, %182 in 1 : vector<32x32xf32>, vector<32x32xf32>, vector<32x32xf32>, vector<32x32xf32>, vector<32x32xf32>, vector<32x32xf32> -> vector<32x192xf32>
    %184 = arith.truncf %183 : vector<32x192xf32> to vector<32x192xbf16>
    %c0_160 = arith.constant 0 : index
    %c0_161 = arith.constant 0 : index
    %185 = vector.load %arg4[%c0_160, %c0_161] : memref<192x32xbf16, #tpu.memory_space<vmem>>, vector<192x32xbf16>
    %cst_162 = arith.constant dense<0.000000e+00> : vector<32x32xf32>
    %186 = tpu.matmul %184, %185, %cst_162 {dimension_numbers = #tpu.dot_dimension_numbers<[1], [0], [0], [1], [0, 0, 1, 1], [], []>} : vector<32x192xbf16>, vector<192x32xbf16>, vector<32x32xf32> -> vector<32x32xf32>
    %c0_163 = arith.constant 0 : index
    %c0_164 = arith.constant 0 : index
    %187 = vector.load %arg5[%c0_163, %c0_164] : memref<1x32xf32, #tpu.memory_space<vmem>>, vector<1x32xf32>
    %188 = vector.broadcast %187 : vector<1x32xf32> to vector<32x32xf32>
    %189 = arith.addf %186, %188 : vector<32x32xf32>
    %190 = arith.addf %189, %143 : vector<32x32xf32>
    %c3_i32_165 = arith.constant 3 : i32
    %191 = vector.broadcast %c3_i32_165 : i32 to vector<32x1xi32>
    %192 = arith.cmpi slt, %0, %191 : vector<32x1xi32>
    %cst_166 = arith.constant 0.000000e+00 : f32
    %193 = vector.shape_cast %192 : vector<32x1xi1> to vector<32x1xi1>
    %194 = vector.broadcast %193 : vector<32x1xi1> to vector<32x32xi1>
    %195 = vector.broadcast %cst_166 : f32 to vector<32x32xf32>
    %196 = arith.select %194, %190, %195 : vector<32x32xi1>, vector<32x32xf32>
    %c8_167 = arith.constant 8 : index
    %c0_168 = arith.constant 0 : index
    %197 = vector.load %arg9[%c8_167, %c0_168] : memref<48x32xf32, #tpu.memory_space<vmem>>, vector<32x32xf32>
    tpu.vector_store %arg9[%c8_167, %c0_168], %196 {strides = array<i32>} : memref<48x32xf32, #tpu.memory_space<vmem>>, vector<32x32xf32>,
    %c8_169 = arith.constant 8 : index
    %c0_170 = arith.constant 0 : index
    %198 = tpu.strided_load %arg9[%c8_169, %c0_170] {strides = array<i32: 2, 1>} : memref<48x32xf32, #tpu.memory_space<vmem>>, vector<1x32xf32>
    %c9_171 = arith.constant 9 : index
    %c0_172 = arith.constant 0 : index
    %199 = tpu.strided_load %arg9[%c9_171, %c0_172] {strides = array<i32: 2, 1>} : memref<48x32xf32, #tpu.memory_space<vmem>>, vector<1x32xf32>
    %c10_173 = arith.constant 10 : index
    %c0_174 = arith.constant 0 : index
    %200 = tpu.strided_load %arg9[%c10_173, %c0_174] {strides = array<i32: 2, 1>} : memref<48x32xf32, #tpu.memory_space<vmem>>, vector<1x32xf32>
    %201 = arith.maximumf %198, %199 : vector<1x32xf32>
    %202 = arith.maximumf %201, %200 : vector<1x32xf32>
    %c0_175 = arith.constant 0 : index
    %c0_176 = arith.constant 0 : index
    %203 = vector.load %arg10[%c0_175, %c0_176] : memref<32x32xf32, #tpu.memory_space<vmem>>, vector<1x32xf32>
    tpu.vector_store %arg10[%c0_175, %c0_176], %202 {strides = array<i32>} : memref<32x32xf32, #tpu.memory_space<vmem>>, vector<1x32xf32>,
    %c24_177 = arith.constant 24 : index
    %c0_178 = arith.constant 0 : index
    %204 = tpu.strided_load %arg9[%c24_177, %c0_178] {strides = array<i32: 2, 1>} : memref<48x32xf32, #tpu.memory_space<vmem>>, vector<1x32xf32>
    %c25_179 = arith.constant 25 : index
    %c0_180 = arith.constant 0 : index
    %205 = tpu.strided_load %arg9[%c25_179, %c0_180] {strides = array<i32: 2, 1>} : memref<48x32xf32, #tpu.memory_space<vmem>>, vector<1x32xf32>
    %c26_181 = arith.constant 26 : index
    %c0_182 = arith.constant 0 : index
    %206 = tpu.strided_load %arg9[%c26_181, %c0_182] {strides = array<i32: 2, 1>} : memref<48x32xf32, #tpu.memory_space<vmem>>, vector<1x32xf32>
    %207 = arith.maximumf %204, %205 : vector<1x32xf32>
    %208 = arith.maximumf %207, %206 : vector<1x32xf32>
    %c16_183 = arith.constant 16 : index
    %c0_184 = arith.constant 0 : index
    %209 = vector.load %arg10[%c16_183, %c0_184] : memref<32x32xf32, #tpu.memory_space<vmem>>, vector<1x32xf32>
    tpu.vector_store %arg10[%c16_183, %c0_184], %208 {strides = array<i32>} : memref<32x32xf32, #tpu.memory_space<vmem>>, vector<1x32xf32>,
    %c0_185 = arith.constant 0 : index
    %c0_186 = arith.constant 0 : index
    %210 = vector.load %arg10[%c0_185, %c0_186] : memref<32x32xf32, #tpu.memory_space<vmem>>, vector<32x32xf32>
    %c1_i32 = arith.constant 1 : i32
    %211 = vector.broadcast %c1_i32 : i32 to vector<32x1xi32>
    %212 = arith.cmpi slt, %0, %211 : vector<32x1xi32>
    %cst_187 = arith.constant 0.000000e+00 : f32
    %213 = vector.broadcast %cst_187 : f32 to vector<32x32xf32>
    %214 = arith.maximumf %210, %213 : vector<32x32xf32>
    %cst_188 = arith.constant 0.000000e+00 : f32
    %215 = vector.shape_cast %212 : vector<32x1xi1> to vector<32x1xi1>
    %216 = vector.broadcast %215 : vector<32x1xi1> to vector<32x32xi1>
    %217 = vector.broadcast %cst_188 : f32 to vector<32x32xf32>
    %218 = arith.select %216, %214, %217 : vector<32x32xi1>, vector<32x32xf32>
    %c8_189 = arith.constant 8 : index
    %c0_190 = arith.constant 0 : index
    %219 = vector.load %arg9[%c8_189, %c0_190] : memref<48x32xf32, #tpu.memory_space<vmem>>, vector<32x32xf32>
    tpu.vector_store %arg9[%c8_189, %c0_190], %218 {strides = array<i32>} : memref<48x32xf32, #tpu.memory_space<vmem>>, vector<32x32xf32>,
    %c6_191 = arith.constant 6 : index
    %c0_192 = arith.constant 0 : index
    %220 = vector.load %arg9[%c6_191, %c0_192] : memref<48x32xf32, #tpu.memory_space<vmem>>, vector<32x32xf32>
    %c7_193 = arith.constant 7 : index
    %c0_194 = arith.constant 0 : index
    %221 = vector.load %arg9[%c7_193, %c0_194] : memref<48x32xf32, #tpu.memory_space<vmem>>, vector<32x32xf32>
    %c8_195 = arith.constant 8 : index
    %c0_196 = arith.constant 0 : index
    %222 = vector.load %arg9[%c8_195, %c0_196] : memref<48x32xf32, #tpu.memory_space<vmem>>, vector<32x32xf32>
    %c9_197 = arith.constant 9 : index
    %c0_198 = arith.constant 0 : index
    %223 = vector.load %arg9[%c9_197, %c0_198] : memref<48x32xf32, #tpu.memory_space<vmem>>, vector<32x32xf32>
    %c10_199 = arith.constant 10 : index
    %c0_200 = arith.constant 0 : index
    %224 = vector.load %arg9[%c10_199, %c0_200] : memref<48x32xf32, #tpu.memory_space<vmem>>, vector<32x32xf32>
    %225 = arith.maximumf %221, %222 : vector<32x32xf32>
    %226 = arith.maximumf %225, %223 : vector<32x32xf32>
    %227 = tpu.concatenate %220, %221, %222, %223, %224, %226 in 1 : vector<32x32xf32>, vector<32x32xf32>, vector<32x32xf32>, vector<32x32xf32>, vector<32x32xf32>, vector<32x32xf32> -> vector<32x192xf32>
    %228 = arith.truncf %227 : vector<32x192xf32> to vector<32x192xbf16>
    %c0_201 = arith.constant 0 : index
    %c0_202 = arith.constant 0 : index
    %229 = vector.load %arg4[%c0_201, %c0_202] : memref<192x32xbf16, #tpu.memory_space<vmem>>, vector<192x32xbf16>
    %cst_203 = arith.constant dense<0.000000e+00> : vector<32x32xf32>
    %230 = tpu.matmul %228, %229, %cst_203 {dimension_numbers = #tpu.dot_dimension_numbers<[1], [0], [0], [1], [0, 0, 1, 1], [], []>} : vector<32x192xbf16>, vector<192x32xbf16>, vector<32x32xf32> -> vector<32x32xf32>
    %c0_204 = arith.constant 0 : index
    %c0_205 = arith.constant 0 : index
    %231 = vector.load %arg5[%c0_204, %c0_205] : memref<1x32xf32, #tpu.memory_space<vmem>>, vector<1x32xf32>
    %232 = vector.broadcast %231 : vector<1x32xf32> to vector<32x32xf32>
    %233 = arith.addf %230, %232 : vector<32x32xf32>
    %c1_i32_206 = arith.constant 1 : i32
    %234 = vector.broadcast %c1_i32_206 : i32 to vector<32x1xi32>
    %235 = arith.cmpi slt, %0, %234 : vector<32x1xi32>
    %cst_207 = arith.constant 0.000000e+00 : f32
    %236 = vector.broadcast %cst_207 : f32 to vector<32x32xf32>
    %237 = arith.maximumf %233, %236 : vector<32x32xf32>
    %cst_208 = arith.constant 0.000000e+00 : f32
    %238 = vector.shape_cast %235 : vector<32x1xi1> to vector<32x1xi1>
    %239 = vector.broadcast %238 : vector<32x1xi1> to vector<32x32xi1>
    %240 = vector.broadcast %cst_208 : f32 to vector<32x32xf32>
    %241 = arith.select %239, %237, %240 : vector<32x32xi1>, vector<32x32xf32>
    %c8_209 = arith.constant 8 : index
    %c0_210 = arith.constant 0 : index
    %242 = vector.load %arg9[%c8_209, %c0_210] : memref<48x32xf32, #tpu.memory_space<vmem>>, vector<32x32xf32>
    tpu.vector_store %arg9[%c8_209, %c0_210], %241 {strides = array<i32>} : memref<48x32xf32, #tpu.memory_space<vmem>>, vector<32x32xf32>,
    %c6_211 = arith.constant 6 : index
    %c0_212 = arith.constant 0 : index
    %243 = vector.load %arg9[%c6_211, %c0_212] : memref<48x32xf32, #tpu.memory_space<vmem>>, vector<32x32xf32>
    %c7_213 = arith.constant 7 : index
    %c0_214 = arith.constant 0 : index
    %244 = vector.load %arg9[%c7_213, %c0_214] : memref<48x32xf32, #tpu.memory_space<vmem>>, vector<32x32xf32>
    %c8_215 = arith.constant 8 : index
    %c0_216 = arith.constant 0 : index
    %245 = vector.load %arg9[%c8_215, %c0_216] : memref<48x32xf32, #tpu.memory_space<vmem>>, vector<32x32xf32>
    %c9_217 = arith.constant 9 : index
    %c0_218 = arith.constant 0 : index
    %246 = vector.load %arg9[%c9_217, %c0_218] : memref<48x32xf32, #tpu.memory_space<vmem>>, vector<32x32xf32>
    %c10_219 = arith.constant 10 : index
    %c0_220 = arith.constant 0 : index
    %247 = vector.load %arg9[%c10_219, %c0_220] : memref<48x32xf32, #tpu.memory_space<vmem>>, vector<32x32xf32>
    %248 = arith.maximumf %244, %245 : vector<32x32xf32>
    %249 = arith.maximumf %248, %246 : vector<32x32xf32>
    %250 = tpu.concatenate %243, %244, %245, %246, %247, %249 in 1 : vector<32x32xf32>, vector<32x32xf32>, vector<32x32xf32>, vector<32x32xf32>, vector<32x32xf32>, vector<32x32xf32> -> vector<32x192xf32>
    %251 = arith.truncf %250 : vector<32x192xf32> to vector<32x192xbf16>
    %c0_221 = arith.constant 0 : index
    %c0_222 = arith.constant 0 : index
    %252 = vector.load %arg4[%c0_221, %c0_222] : memref<192x32xbf16, #tpu.memory_space<vmem>>, vector<192x32xbf16>
    %cst_223 = arith.constant dense<0.000000e+00> : vector<32x32xf32>
    %253 = tpu.matmul %251, %252, %cst_223 {dimension_numbers = #tpu.dot_dimension_numbers<[1], [0], [0], [1], [0, 0, 1, 1], [], []>} : vector<32x192xbf16>, vector<192x32xbf16>, vector<32x32xf32> -> vector<32x32xf32>
    %c0_224 = arith.constant 0 : index
    %c0_225 = arith.constant 0 : index
    %254 = vector.load %arg5[%c0_224, %c0_225] : memref<1x32xf32, #tpu.memory_space<vmem>>, vector<1x32xf32>
    %255 = vector.broadcast %254 : vector<1x32xf32> to vector<32x32xf32>
    %256 = arith.addf %253, %255 : vector<32x32xf32>
    %257 = arith.addf %256, %210 : vector<32x32xf32>
    %258 = vector.extract_strided_slice %257 {offsets = [0, 0], sizes = [1, 32], strides = [1, 1]} : vector<32x32xf32> to vector<1x32xf32>
    %259 = vector.extract_strided_slice %257 {offsets = [16, 0], sizes = [1, 32], strides = [1, 1]} : vector<32x32xf32> to vector<1x32xf32>
    %260 = tpu.concatenate %258, %259 in 0 : vector<1x32xf32>, vector<1x32xf32> -> vector<2x32xf32>
    %261 = arith.truncf %260 : vector<2x32xf32> to vector<2x32xbf16>
    %c0_226 = arith.constant 0 : index
    %c0_227 = arith.constant 0 : index
    %262 = vector.load %arg6[%c0_226, %c0_227] : memref<32x128xbf16, #tpu.memory_space<vmem>>, vector<32x128xbf16>
    %cst_228 = arith.constant dense<0.000000e+00> : vector<2x128xf32>
    %263 = tpu.matmul %261, %262, %cst_228 {dimension_numbers = #tpu.dot_dimension_numbers<[1], [0], [0], [1], [0, 0, 1, 1], [], []>} : vector<2x32xbf16>, vector<32x128xbf16>, vector<2x128xf32> -> vector<2x128xf32>
    %c0_229 = arith.constant 0 : index
    %c0_230 = arith.constant 0 : index
    %264 = vector.load %arg7[%c0_229, %c0_230] : memref<1x128xf32, #tpu.memory_space<vmem>>, vector<1x128xf32>
    %265 = vector.broadcast %264 : vector<1x128xf32> to vector<2x128xf32>
    %266 = arith.addf %263, %265 : vector<2x128xf32>
    %c0_231 = arith.constant 0 : index
    %c0_232 = arith.constant 0 : index
    %267 = vector.load %arg8[%c0_231, %c0_232] : memref<2x128xf32, #tpu.memory_space<vmem>>, vector<2x128xf32>
    tpu.vector_store %arg8[%c0_231, %c0_232], %266 {strides = array<i32>} : memref<2x128xf32, #tpu.memory_space<vmem>>, vector<2x128xf32>,
    return
  }
}

</mosaic_0001>

<llo_original>
// kernel: tile.0
$region0: #{tile.0}
  %s0 = inlined_call_operand.vmem [shape: s32[2,16], index: 0, kind: input, shape index: {}]
  %s1 = inlined_call_operand.vmem [shape: s32[32,1], index: 1, kind: output, shape index: {}]
  $region1: #{tile.0} parent=0
    #allocation0 [shape = 'u8[4096]{0}', space=vmem, size = 0x1000, scoped, tag = 'scoped mem for input reshape']
    %s3 = ssub.s32 4, 1
    %v4 = vld [vmem:[%s0] sm:%s3]
    %5 = vst [vmem:[#allocation0] sm:%s3] %v4
    %v6 = vld [vmem:[#allocation0] sm:$0x3]
    %vm7 = vcmask 7168
    %8 = vst.msk [vmem:[%s1] ss:$16 sm:$0x3] %vm7, %v6
    %v9 = vld [vmem:[#allocation0] sm:$0x3]
    %10 = vrot.lane.b32.xlu0 %v9, 127
    %v11 = vpop.permute.xlu0 %10
    %vm12 = vcmask 7168
    %s13 = scalar_lea.vmem %s1, 1
    %14 = vst.msk [vmem:[%s13] ss:$16 sm:$0x3] %vm12, %v11
    %v15 = vld [vmem:[#allocation0] sm:$0x3]
    %16 = vrot.lane.b32.xlu0 %v15, 126
    %v17 = vpop.permute.xlu0 %16
    %vm18 = vcmask 7168
    %s19 = scalar_lea.vmem %s1, 2
    %20 = vst.msk [vmem:[%s19] ss:$16 sm:$0x3] %vm18, %v17
    %v21 = vld [vmem:[#allocation0] sm:$0x3]
    %22 = vrot.lane.b32.xlu0 %v21, 125
    %v23 = vpop.permute.xlu0 %22
    %vm24 = vcmask 7168
    %s25 = scalar_lea.vmem %s1, 3
    %26 = vst.msk [vmem:[%s25] ss:$16 sm:$0x3] %vm24, %v23
    %v27 = vld [vmem:[#allocation0] sm:$0x3]
    %28 = vrot.lane.b32.xlu0 %v27, 124
    %v29 = vpop.permute.xlu0 %28
    %vm30 = vcmask 7168
    %s31 = scalar_lea.vmem %s1, 4
    %32 = vst.msk [vmem:[%s31] ss:$16 sm:$0x3] %vm30, %v29
    %v33 = vld [vmem:[#allocation0] sm:$0x3]
    %34 = vrot.lane.b32.xlu0 %v33, 123
    %v35 = vpop.permute.xlu0 %34
    %vm36 = vcmask 7168
    %s37 = scalar_lea.vmem %s1, 5
    %38 = vst.msk [vmem:[%s37] ss:$16 sm:$0x3] %vm36, %v35
    %v39 = vld [vmem:[#allocation0] sm:$0x3]
    %40 = vrot.lane.b32.xlu0 %v39, 122
    %v41 = vpop.permute.xlu0 %40
    %vm42 = vcmask 7168
    %s43 = scalar_lea.vmem %s1, 6
    %44 = vst.msk [vmem:[%s43] ss:$16 sm:$0x3] %vm42, %v41
    %v45 = vld [vmem:[#allocation0] sm:$0x3]
    %46 = vrot.lane.b32.xlu0 %v45, 121
    %v47 = vpop.permute.xlu0 %46
    %vm48 = vcmask 7168
    %s49 = scalar_lea.vmem %s1, 7
    %50 = vst.msk [vmem:[%s49] ss:$16 sm:$0x3] %vm48, %v47
    %v51 = vld [vmem:[#allocation0] sm:$0x3]
    %52 = vrot.lane.b32.xlu0 %v51, 120
    %v53 = vpop.permute.xlu0 %52
    %vm54 = vcmask 7168
    %s55 = scalar_lea.vmem %s1, 8
    %56 = vst.msk [vmem:[%s55] ss:$16 sm:$0x3] %vm54, %v53
    %v57 = vld [vmem:[#allocation0] sm:$0x3]
    %58 = vrot.lane.b32.xlu0 %v57, 119
    %v59 = vpop.permute.xlu0 %58
    %vm60 = vcmask 7168
    %s61 = scalar_lea.vmem %s1, 9
    %62 = vst.msk [vmem:[%s61] ss:$16 sm:$0x3] %vm60, %v59
    %v63 = vld [vmem:[#allocation0] sm:$0x3]
    %64 = vrot.lane.b32.xlu0 %v63, 118
    %v65 = vpop.permute.xlu0 %64
    %vm66 = vcmask 7168
    %s67 = scalar_lea.vmem %s1, 10
    %68 = vst.msk [vmem:[%s67] ss:$16 sm:$0x3] %vm66, %v65
    %v69 = vld [vmem:[#allocation0] sm:$0x3]
    %70 = vrot.lane.b32.xlu0 %v69, 117
    %v71 = vpop.permute.xlu0 %70
    %vm72 = vcmask 7168
    %s73 = scalar_lea.vmem %s1, 11
    %74 = vst.msk [vmem:[%s73] ss:$16 sm:$0x3] %vm72, %v71
    %v75 = vld [vmem:[#allocation0] sm:$0x3]
    %76 = vrot.lane.b32.xlu0 %v75, 116
    %v77 = vpop.permute.xlu0 %76
    %vm78 = vcmask 7168
    %s79 = scalar_lea.vmem %s1, 12
    %80 = vst.msk [vmem:[%s79] ss:$16 sm:$0x3] %vm78, %v77
    %v81 = vld [vmem:[#allocation0] sm:$0x3]
    %82 = vrot.lane.b32.xlu0 %v81, 115
    %v83 = vpop.permute.xlu0 %82
    %vm84 = vcmask 7168
    %s85 = scalar_lea.vmem %s1, 13
    %86 = vst.msk [vmem:[%s85] ss:$16 sm:$0x3] %vm84, %v83
    %v87 = vld [vmem:[#allocation0] sm:$0x3]
    %88 = vrot.lane.b32.xlu0 %v87, 114
    %v89 = vpop.permute.xlu0 %88
    %vm90 = vcmask 7168
    %s91 = scalar_lea.vmem %s1, 14
    %92 = vst.msk [vmem:[%s91] ss:$16 sm:$0x3] %vm90, %v89
    %v93 = vld [vmem:[#allocation0] sm:$0x3]
    %94 = vrot.lane.b32.xlu0 %v93, 113
    %v95 = vpop.permute.xlu0 %94
    %vm96 = vcmask 7168
    %s97 = scalar_lea.vmem %s1, 15
    %98 = vst.msk [vmem:[%s97] ss:$16 sm:$0x3] %vm96, %v95

// kernel: dpcnn_forward.1
$region0: #{dpcnn_forward.1}
  #allocation0 [shape = 'u32[]', space=smem, size = 0x4, offset = 0x4, fixed_abs, tag = 'smem constant byte address 0x4 - core index']
  #allocation1 [shape = 'u32[72,128]{1,0:T(1,128)}', space=vmem, size = 0x9000, scoped, tag = 'internal scratch']
  #allocation2 [shape = 'f32[48,32]{1,0:T(8,128)}', space=vmem, size = 0x6000, scoped, tag = 'scratch operand']
  #allocation3 [shape = 'f32[32,32]{1,0:T(8,128)}', space=vmem, size = 0x4000, scoped, tag = 'scratch operand']
  %s0 = inlined_call_operand.vmem [shape: s32[32,1], index: 0, kind: input, shape index: {}]
  %s1 = inlined_call_operand.vmem [shape: bf16[32,80], index: 1, kind: input, shape index: {}]
  %s2 = inlined_call_operand.vmem [shape: bf16[80,32], index: 2, kind: input, shape index: {}]
  %s3 = inlined_call_operand.vmem [shape: f32[1,32], index: 3, kind: input, shape index: {}]
  %s4 = inlined_call_operand.vmem [shape: bf16[192,32], index: 4, kind: input, shape index: {}]
  %s5 = inlined_call_operand.vmem [shape: f32[1,32], index: 5, kind: input, shape index: {}]
  %s6 = inlined_call_operand.vmem [shape: bf16[32,128], index: 6, kind: input, shape index: {}]
  %s7 = inlined_call_operand.vmem [shape: f32[1,128], index: 7, kind: input, shape index: {}]
  %s8 = inlined_call_operand.hbm [shape: f32[2,128], index: 8, kind: output, shape index: {}]
  %s9 = sld [smem:[#allocation0]]
  $region42: #{dpcnn_forward.1} parent=0
    _
  %s11 = ssub.s32 1, %s9
  %s12 = scalar_select 0, %s11, %s9
  $region1: #{dpcnn_forward.1} parent=0
    #allocation4 [shape = 'u8[1024]{0}', space=vmem, size = 0x400, scoped, tag = 'output window, operand 0, single buffered']
    #allocation5 [shape = 's32[1]{0}', space=sflag, size = 0x4, scoped, tag = 'scoped memory for dpcnn_forward.1']
    %13 = vsyncpa [#allocation5], 0
    // Predicated region
    $region2: #{dpcnn_forward.1} parent=1 // pred_check
      _
    $region3: #{dpcnn_forward.1} parent=1 // pred_check_branch
      %15 = sbr.rel (0) target = $region5
    $region4: #{dpcnn_forward.1} parent=1 // pred_region
      _
    $region5: #{dpcnn_forward.1} parent=1 // pred_fallthru
      _
    // Predicated region
    $region6: #{dpcnn_forward.1} parent=1 // pred_check
      _
    $region7: #{dpcnn_forward.1} parent=1 // pred_check_branch
      %17 = sbr.rel (0) target = $region9
    $region8: #{dpcnn_forward.1} parent=1 // pred_region
      _
    $region9: #{dpcnn_forward.1} parent=1 // pred_fallthru
      _
    // Predicated region
    $region10: #{dpcnn_forward.1} parent=1 // pred_check
      _
    $region11: #{dpcnn_forward.1} parent=1 // pred_check_branch
      %19 = sbr.rel (0) target = $region13
    $region12: #{dpcnn_forward.1} parent=1 // pred_region
      _
    $region13: #{dpcnn_forward.1} parent=1 // pred_fallthru
      _
    // Predicated region
    $region14: #{dpcnn_forward.1} parent=1 // pred_check
      _
    $region15: #{dpcnn_forward.1} parent=1 // pred_check_branch
      %21 = sbr.rel (0) target = $region17
    $region16: #{dpcnn_forward.1} parent=1 // pred_region
      _
    $region17: #{dpcnn_forward.1} parent=1 // pred_fallthru
      _
    // Predicated region
    $region18: #{dpcnn_forward.1} parent=1 // pred_check
      _
    $region19: #{dpcnn_forward.1} parent=1 // pred_check_branch
      %23 = sbr.rel (0) target = $region21
    $region20: #{dpcnn_forward.1} parent=1 // pred_region
      _
    $region21: #{dpcnn_forward.1} parent=1 // pred_fallthru
      _
    // Predicated region
    $region22: #{dpcnn_forward.1} parent=1 // pred_check
      _
    $region23: #{dpcnn_forward.1} parent=1 // pred_check_branch
      %25 = sbr.rel (0) target = $region25
    $region24: #{dpcnn_forward.1} parent=1 // pred_region
      _
    $region25: #{dpcnn_forward.1} parent=1 // pred_fallthru
      _
    // Predicated region
    $region26: #{dpcnn_forward.1} parent=1 // pred_check
      _
    $region27: #{dpcnn_forward.1} parent=1 // pred_check_branch
      %27 = sbr.rel (0) target = $region29
    $region28: #{dpcnn_forward.1} parent=1 // pred_region
      _
    $region29: #{dpcnn_forward.1} parent=1 // pred_fallthru
      _
    // Predicated region
    $region30: #{dpcnn_forward.1} parent=1 // pred_check
      _
    $region31: #{dpcnn_forward.1} parent=1 // pred_check_branch
      %29 = sbr.rel (0) target = $region33
    $region32: #{dpcnn_forward.1} parent=1 // pred_region
      _
    $region33: #{dpcnn_forward.1} parent=1 // pred_fallthru
      _
    %v31 = vld [vmem:[%s0] sm:$0xff]
    %v32 = vld [vmem:[%s0 + $0x8] sm:$0xff]
    %v33 = vld [vmem:[%s0 + $0x10] sm:$0xff]
    %v34 = vld [vmem:[%s0 + $0x18] sm:$0xff]
    %vm35 = vcmask 261120
    %36 = vst.msk [vmem:[#allocation2] sm:$0xff] %vm35, 0.0
    %37 = vst.msk [vmem:[#allocation2 + $0x8] sm:$0xff] %vm35, 0.0
    %38 = vst.msk [vmem:[#allocation2 + $0x10] sm:$0xff] %vm35, 0.0
    %39 = vst.msk [vmem:[#allocation2 + $0x18] sm:$0xff] %vm35, 0.0
    %40 = vst.msk [vmem:[#allocation2 + $0x20] sm:$0xff] %vm35, 0.0
    %41 = vst.msk [vmem:[#allocation2 + $0x28] sm:$0xff] %vm35, 0.0
    %42 = vst.msk [vmem:[#allocation3] sm:$0xff] %vm35, 0.0
    %43 = vst.msk [vmem:[#allocation3 + $0x8] sm:$0xff] %vm35, 0.0
    %44 = vst.msk [vmem:[#allocation3 + $0x10] sm:$0xff] %vm35, 0.0
    %45 = vst.msk [vmem:[#allocation3 + $0x18] sm:$0xff] %vm35, 0.0
    %v46 = vld [vmem:[%s1] sm:$0xf]
    %v47 = vld [vmem:[%s1 + $0x4] sm:$0xf]
    %v48 = vld [vmem:[%s1 + $0x8] sm:$0xf]
    %v49 = vld [vmem:[%s1 + $0xc] sm:$0xf]
    %v50 = vld [vmem:[%s2] sm:$0xf]
    %v51 = vld [vmem:[%s2 + $0x4] sm:$0xf]
    %v52 = vld [vmem:[%s2 + $0x8] sm:$0xf]
    %v53 = vld [vmem:[%s2 + $0xc] sm:$0xf]
    %v54 = vld [vmem:[%s2 + $0x10] sm:$0xf]
    %v55 = vld [vmem:[%s2 + $0x14] sm:$0xf]
    %v56 = vld [vmem:[%s2 + $0x18] sm:$0xf]
    %v57 = vld [vmem:[%s2 + $0x1c] sm:$0xf]
    %v58 = vld [vmem:[%s2 + $0x20] sm:$0xf]
    %v59 = vld [vmem:[%s2 + $0x24] sm:$0xf]
    %v60 = vld [vmem:[%s3] sm:$0x1]
    %v62 = vperm.slane %v60, 0
    %v68 = vunpack.c.l.b16 %v46
    %v69 = vunpack.c.l.b16 %v47
    %v70 = vunpack.c.l.b16 %v48
    %v71 = vunpack.c.l.b16 %v49
    %v72 = vpack.c.b16 %v69, %v68
    %v73 = vpack.c.b16 %v71, %v70
    %v84 = vunpack.c.l.b16 %v50
    %v85 = vunpack.c.l.b16 %v51
    %v86 = vunpack.c.l.b16 %v52
    %v87 = vunpack.c.l.b16 %v53
    %v88 = vunpack.c.l.b16 %v54
    %v89 = vunpack.c.l.b16 %v55
    %v90 = vunpack.c.l.b16 %v56
    %v91 = vunpack.c.l.b16 %v57
    %v92 = vunpack.c.l.b16 %v58
    %v93 = vunpack.c.l.b16 %v59
    %v94 = vpack.c.b16 %v85, %v84
    %v95 = vpack.c.b16 %v87, %v86
    %v96 = vpack.c.b16 %v89, %v88
    %v97 = vpack.c.b16 %v91, %v90
    %v98 = vpack.c.b16 %v93, %v92
    %vm104 = vcmask 654336
    %v106 = vsel %vm104, %v72, 0
    %v109 = vsel %vm104, %v73, 0
    %111 = vmatpush.bf16.msra.mxu0 0
    %112 = vmatpush.bf16.msra.mxu0 0
    %113 = vmatpush.bf16.msra.mxu0 0
    %114 = vmatpush.bf16.msra.mxu0 %v98
    %115 = vmatpush.bf16.msra.mxu0 %v97
    %116 = vmatpush.bf16.msra.mxu0 %v96
    %117 = vmatpush.bf16.msra.mxu0 %v95
    %118 = vmatpush.bf16.msra.mxu0 %v94
    %119 = vmatmul.bf16.gmra.mxu0 %v106
    %v120 = vpop.f32.mrf.mxu0
    %v121 = vadd.f32 %v62, %v120
    %v122 = vpop.f32.mrf.mxu0
    %v123 = vadd.f32 %v62, %v122
    %124 = vmatmul.bf16.gmra.mxu0 %v109
    %v125 = vpop.f32.mrf.mxu0
    %v126 = vadd.f32 %v62, %v125
    %v127 = vpop.f32.mrf.mxu0
    %v128 = vadd.f32 %v62, %v127
    %129 = vdwg.mxu0
    %vm130 = vcmp.lt.s32.totalorder %v31, 12
    %vm131 = vcmp.lt.s32.totalorder %v32, 12
    %vm132 = vcmp.lt.s32.totalorder %v33, 12
    %vm133 = vcmp.lt.s32.totalorder %v34, 12
    %v134 = vmax.f32 %v121, 0.0
    %v135 = vmax.f32 %v123, 0.0
    %v136 = vmax.f32 %v126, 0.0
    %v137 = vmax.f32 %v128, 0.0
    %v138 = vsel %vm130, 1, 0
    %v139 = vsel %vm131, 1, 0
    %v140 = vsel %vm132, 1, 0
    %v141 = vsel %vm133, 1, 0
    %142 = vset.pattern.permute.xlu0 0
    %143 = vperm.xlu0 %142, %v138
    %v144 = vpop.permute.xlu0 %143
    %145 = vset.pattern.permute.xlu0 0
    %146 = vperm.xlu0 %145, %v139
    %v147 = vpop.permute.xlu0 %146
    %148 = vset.pattern.permute.xlu0 0
    %149 = vperm.xlu0 %148, %v140
    %v150 = vpop.permute.xlu0 %149
    %151 = vset.pattern.permute.xlu0 0
    %152 = vperm.xlu0 %151, %v141
    %v153 = vpop.permute.xlu0 %152
    %vm154 = vcmp.eq.s32.totalorder %v144, 1
    %vm155 = vcmp.eq.s32.totalorder %v147, 1
    %vm156 = vcmp.eq.s32.totalorder %v150, 1
    %vm157 = vcmp.eq.s32.totalorder %v153, 1
    %v158 = vsel %vm154, %v134, 0.0
    %v159 = vsel %vm155, %v135, 0.0
    %v160 = vsel %vm156, %v136, 0.0
    %v161 = vsel %vm157, %v137, 0.0
    %162 = vst.msk [vmem:[#allocation2 + $0x8] sm:$0xff] %vm35, %v158
    %163 = vst.msk [vmem:[#allocation2 + $0x10] sm:$0xff] %vm35, %v159
    %164 = vst.msk [vmem:[#allocation2 + $0x18] sm:$0xff] %vm35, %v160
    %165 = vst.msk [vmem:[#allocation2 + $0x20] sm:$0xff] %vm35, %v161
    %v166 = vld [vmem:[#allocation2 + $0x6] sm:$0xff]
    %v167 = vld [vmem:[#allocation2 + $0xe] sm:$0xff]
    %v168 = vld [vmem:[#allocation2 + $0x16] sm:$0xff]
    %v169 = vld [vmem:[#allocation2 + $0x1e] sm:$0xff]
    %v170 = vld [vmem:[#allocation2 + $0x7] sm:$0xff]
    %v171 = vld [vmem:[#allocation2 + $0xf] sm:$0xff]
    %v172 = vld [vmem:[#allocation2 + $0x17] sm:$0xff]
    %v173 = vld [vmem:[#allocation2 + $0x1f] sm:$0xff]
    %v174 = vld [vmem:[#allocation2 + $0x8] sm:$0xff]
    %v175 = vld [vmem:[#allocation2 + $0x10] sm:$0xff]
    %v176 = vld [vmem:[#allocation2 + $0x18] sm:$0xff]
    %v177 = vld [vmem:[#allocation2 + $0x20] sm:$0xff]
    %v178 = vld [vmem:[#allocation2 + $0x9] sm:$0xff]
    %v179 = vld [vmem:[#allocation2 + $0x11] sm:$0xff]
    %v180 = vld [vmem:[#allocation2 + $0x19] sm:$0xff]
    %v181 = vld [vmem:[#allocation2 + $0x21] sm:$0xff]
    %v182 = vld [vmem:[#allocation2 + $0xa] sm:$0xff]
    %v183 = vld [vmem:[#allocation2 + $0x12] sm:$0xff]
    %v184 = vld [vmem:[#allocation2 + $0x1a] sm:$0xff]
    %v185 = vld [vmem:[#allocation2 + $0x22] sm:$0xff]
    %v186 = vmax.f32 %v170, %v174
    %v187 = vmax.f32 %v171, %v175
    %v188 = vmax.f32 %v172, %v176
    %v189 = vmax.f32 %v173, %v177
    %v190 = vmax.f32 %v186, %v178
    %v191 = vmax.f32 %v187, %v179
    %v192 = vmax.f32 %v188, %v180
    %v193 = vmax.f32 %v189, %v181
    %198 = vrot.lane.b32.xlu0 %v170, 32
    %v199 = vpop.permute.xlu0 %198
    %200 = vrot.lane.b32.xlu0 %v171, 32
    %v201 = vpop.permute.xlu0 %200
    %202 = vrot.lane.b32.xlu0 %v172, 32
    %v203 = vpop.permute.xlu0 %202
    %204 = vrot.lane.b32.xlu0 %v173, 32
    %v205 = vpop.permute.xlu0 %204
    %214 = vrot.lane.b32.xlu0 %v174, 64
    %v215 = vpop.permute.xlu0 %214
    %216 = vrot.lane.b32.xlu0 %v175, 64
    %v217 = vpop.permute.xlu0 %216
    %218 = vrot.lane.b32.xlu0 %v176, 64
    %v219 = vpop.permute.xlu0 %218
    %220 = vrot.lane.b32.xlu0 %v177, 64
    %v221 = vpop.permute.xlu0 %220
    %230 = vrot.lane.b32.xlu0 %v178, 96
    %v231 = vpop.permute.xlu0 %230
    %232 = vrot.lane.b32.xlu0 %v179, 96
    %v233 = vpop.permute.xlu0 %232
    %234 = vrot.lane.b32.xlu0 %v180, 96
    %v235 = vpop.permute.xlu0 %234
    %236 = vrot.lane.b32.xlu0 %v181, 96
    %v237 = vpop.permute.xlu0 %236
    %246 = vrot.lane.b32.xlu0 %v190, 32
    %v247 = vpop.permute.xlu0 %246
    %248 = vrot.lane.b32.xlu0 %v191, 32
    %v249 = vpop.permute.xlu0 %248
    %250 = vrot.lane.b32.xlu0 %v192, 32
    %v251 = vpop.permute.xlu0 %250
    %252 = vrot.lane.b32.xlu0 %v193, 32
    %v253 = vpop.permute.xlu0 %252
    %v258 = vsel %vm35, %v166, %v199
    %v259 = vsel %vm35, %v167, %v201
    %v260 = vsel %vm35, %v168, %v203
    %v261 = vsel %vm35, %v169, %v205
    %vm262 = vcmask 523264
    %v263 = vsel %vm262, %v258, %v215
    %v264 = vsel %vm262, %v259, %v217
    %v265 = vsel %vm262, %v260, %v219
    %v266 = vsel %vm262, %v261, %v221
    %vm267 = vcmask 785408
    %v268 = vsel %vm267, %v263, %v231
    %v269 = vsel %vm267, %v264, %v233
    %v270 = vsel %vm267, %v265, %v235
    %v271 = vsel %vm267, %v266, %v237
    %v272 = vsel %vm35, %v182, %v247
    %v273 = vsel %vm35, %v183, %v249
    %v274 = vsel %vm35, %v184, %v251
    %v275 = vsel %vm35, %v185, %v253
    %v276 = vpack.c.bf16 %v269, %v268
    %v277 = vpack.c.bf16 %v273, %v272
    %v278 = vpack.c.bf16 %v271, %v270
    %v279 = vpack.c.bf16 %v275, %v274
    %v280 = vld [vmem:[%s4] sm:$0xf]
    %v281 = vld [vmem:[%s4 + $0x4] sm:$0xf]
    %v282 = vld [vmem:[%s4 + $0x8] sm:$0xf]
    %v283 = vld [vmem:[%s4 + $0xc] sm:$0xf]
    %v284 = vld [vmem:[%s4 + $0x10] sm:$0xf]
    %v285 = vld [vmem:[%s4 + $0x14] sm:$0xf]
    %v286 = vld [vmem:[%s4 + $0x18] sm:$0xf]
    %v287 = vld [vmem:[%s4 + $0x1c] sm:$0xf]
    %v288 = vld [vmem:[%s4 + $0x20] sm:$0xf]
    %v289 = vld [vmem:[%s4 + $0x24] sm:$0xf]
    %v290 = vld [vmem:[%s4 + $0x28] sm:$0xf]
    %v291 = vld [vmem:[%s4 + $0x2c] sm:$0xf]
    %v292 = vld [vmem:[%s4 + $0x30] sm:$0xf]
    %v293 = vld [vmem:[%s4 + $0x34] sm:$0xf]
    %v294 = vld [vmem:[%s4 + $0x38] sm:$0xf]
    %v295 = vld [vmem:[%s4 + $0x3c] sm:$0xf]
    %v296 = vld [vmem:[%s4 + $0x40] sm:$0xf]
    %v297 = vld [vmem:[%s4 + $0x44] sm:$0xf]
    %v298 = vld [vmem:[%s4 + $0x48] sm:$0xf]
    %v299 = vld [vmem:[%s4 + $0x4c] sm:$0xf]
    %v300 = vld [vmem:[%s4 + $0x50] sm:$0xf]
    %v301 = vld [vmem:[%s4 + $0x54] sm:$0xf]
    %v302 = vld [vmem:[%s4 + $0x58] sm:$0xf]
    %v303 = vld [vmem:[%s4 + $0x5c] sm:$0xf]
    %v304 = vld [vmem:[%s5] sm:$0x1]
    %v306 = vperm.slane %v304, 0
    %v332 = vunpack.c.l.b16 %v280
    %v333 = vunpack.c.l.b16 %v281
    %v334 = vunpack.c.l.b16 %v282
    %v335 = vunpack.c.l.b16 %v283
    %v336 = vunpack.c.l.b16 %v284
    %v337 = vunpack.c.l.b16 %v285
    %v338 = vunpack.c.l.b16 %v286
    %v339 = vunpack.c.l.b16 %v287
    %v340 = vunpack.c.l.b16 %v288
    %v341 = vunpack.c.l.b16 %v289
    %v342 = vunpack.c.l.b16 %v290
    %v343 = vunpack.c.l.b16 %v291
    %v344 = vunpack.c.l.b16 %v292
    %v345 = vunpack.c.l.b16 %v293
    %v346 = vunpack.c.l.b16 %v294
    %v347 = vunpack.c.l.b16 %v295
    %v348 = vunpack.c.l.b16 %v296
    %v349 = vunpack.c.l.b16 %v297
    %v350 = vunpack.c.l.b16 %v298
    %v351 = vunpack.c.l.b16 %v299
    %v352 = vunpack.c.l.b16 %v300
    %v353 = vunpack.c.l.b16 %v301
    %v354 = vunpack.c.l.b16 %v302
    %v355 = vunpack.c.l.b16 %v303
    %v356 = vpack.c.b16 %v333, %v332
    %v357 = vpack.c.b16 %v335, %v334
    %v358 = vpack.c.b16 %v337, %v336
    %v359 = vpack.c.b16 %v339, %v338
    %v360 = vpack.c.b16 %v341, %v340
    %v361 = vpack.c.b16 %v343, %v342
    %v362 = vpack.c.b16 %v345, %v344
    %v363 = vpack.c.b16 %v347, %v346
    %v364 = vpack.c.b16 %v349, %v348
    %v365 = vpack.c.b16 %v351, %v350
    %v366 = vpack.c.b16 %v353, %v352
    %v367 = vpack.c.b16 %v355, %v354
    %v381 = vsel %vm262, %v277, 0
    %v384 = vsel %vm262, %v279, 0
    %386 = vmatpush.bf16.msra.mxu0 %v363
    %387 = vmatpush.bf16.msra.mxu0 %v362
    %388 = vmatpush.bf16.msra.mxu0 %v361
    %389 = vmatpush.bf16.msra.mxu0 %v360
    %390 = vmatpush.bf16.msra.mxu0 %v359
    %391 = vmatpush.bf16.msra.mxu0 %v358
    %392 = vmatpush.bf16.msra.mxu0 %v357
    %393 = vmatpush.bf16.msra.mxu0 %v356
    %394 = vmatmul.bf16.gmra.mxu0 %v276
    %v395 = vpop.f32.mrf.mxu0
    %v396 = vadd.f32 %v306, %v395
    %v397 = vpop.f32.mrf.mxu0
    %v398 = vadd.f32 %v306, %v397
    %399 = vmatmul.bf16.gmra.mxu0 %v278
    %v400 = vpop.f32.mrf.mxu0
    %v401 = vadd.f32 %v306, %v400
    %v402 = vpop.f32.mrf.mxu0
    %v403 = vadd.f32 %v306, %v402
    %404 = vdwg.mxu0
    %405 = vmatpush.bf16.msra.mxu0 0
    %406 = vmatpush.bf16.msra.mxu0 0
    %407 = vmatpush.bf16.msra.mxu0 0
    %408 = vmatpush.bf16.msra.mxu0 0
    %409 = vmatpush.bf16.msra.mxu0 %v367
    %410 = vmatpush.bf16.msra.mxu0 %v366
    %411 = vmatpush.bf16.msra.mxu0 %v365
    %412 = vmatpush.bf16.msra.mxu0 %v364
    %413 = vmatmul.bf16.gmra.mxu0 %v381
    %v414 = vpop.f32.mrf.mxu0
    %v415 = vadd.f32 %v396, %v414
    %v416 = vpop.f32.mrf.mxu0
    %v417 = vadd.f32 %v398, %v416
    %418 = vmatmul.bf16.gmra.mxu0 %v384
    %v419 = vpop.f32.mrf.mxu0
    %v420 = vadd.f32 %v401, %v419
    %v421 = vpop.f32.mrf.mxu0
    %v422 = vadd.f32 %v403, %v421
    %423 = vdwg.mxu0
    %v424 = vmax.f32 %v415, 0.0
    %v425 = vmax.f32 %v417, 0.0
    %v426 = vmax.f32 %v420, 0.0
    %v427 = vmax.f32 %v422, 0.0
    %v428 = vsel %vm154, %v424, 0.0
    %v429 = vsel %vm155, %v425, 0.0
    %v430 = vsel %vm156, %v426, 0.0
    %v431 = vsel %vm157, %v427, 0.0
    %432 = vst.msk [vmem:[#allocation2 + $0x8] sm:$0xff] %vm35, %v428
    %433 = vst.msk [vmem:[#allocation2 + $0x10] sm:$0xff] %vm35, %v429
    %434 = vst.msk [vmem:[#allocation2 + $0x18] sm:$0xff] %vm35, %v430
    %435 = vst.msk [vmem:[#allocation2 + $0x20] sm:$0xff] %vm35, %v431
    %v436 = vld [vmem:[#allocation2 + $0x6] sm:$0xff]
    %v437 = vld [vmem:[#allocation2 + $0xe] sm:$0xff]
    %v438 = vld [vmem:[#allocation2 + $0x16] sm:$0xff]
    %v439 = vld [vmem:[#allocation2 + $0x1e] sm:$0xff]
    %v440 = vld [vmem:[#allocation2 + $0x7] sm:$0xff]
    %v441 = vld [vmem:[#allocation2 + $0xf] sm:$0xff]
    %v442 = vld [vmem:[#allocation2 + $0x17] sm:$0xff]
    %v443 = vld [vmem:[#allocation2 + $0x1f] sm:$0xff]
    %v444 = vld [vmem:[#allocation2 + $0x8] sm:$0xff]
    %v445 = vld [vmem:[#allocation2 + $0x10] sm:$0xff]
    %v446 = vld [vmem:[#allocation2 + $0x18] sm:$0xff]
    %v447 = vld [vmem:[#allocation2 + $0x20] sm:$0xff]
    %v448 = vld [vmem:[#allocation2 + $0x9] sm:$0xff]
    %v449 = vld [vmem:[#allocation2 + $0x11] sm:$0xff]
    %v450 = vld [vmem:[#allocation2 + $0x19] sm:$0xff]
    %v451 = vld [vmem:[#allocation2 + $0x21] sm:$0xff]
    %v452 = vld [vmem:[#allocation2 + $0xa] sm:$0xff]
    %v453 = vld [vmem:[#allocation2 + $0x12] sm:$0xff]
    %v454 = vld [vmem:[#allocation2 + $0x1a] sm:$0xff]
    %v455 = vld [vmem:[#allocation2 + $0x22] sm:$0xff]
    %v456 = vmax.f32 %v440, %v444
    %v457 = vmax.f32 %v441, %v445
    %v458 = vmax.f32 %v442, %v446
    %v459 = vmax.f32 %v443, %v447
    %v460 = vmax.f32 %v456, %v448
    %v461 = vmax.f32 %v457, %v449
    %v462 = vmax.f32 %v458, %v450
    %v463 = vmax.f32 %v459, %v451
    %468 = vrot.lane.b32.xlu0 %v440, 32
    %v469 = vpop.permute.xlu0 %468
    %470 = vrot.lane.b32.xlu0 %v441, 32
    %v471 = vpop.permute.xlu0 %470
    %472 = vrot.lane.b32.xlu0 %v442, 32
    %v473 = vpop.permute.xlu0 %472
    %474 = vrot.lane.b32.xlu0 %v443, 32
    %v475 = vpop.permute.xlu0 %474
    %484 = vrot.lane.b32.xlu0 %v444, 64
    %v485 = vpop.permute.xlu0 %484
    %486 = vrot.lane.b32.xlu0 %v445, 64
    %v487 = vpop.permute.xlu0 %486
    %488 = vrot.lane.b32.xlu0 %v446, 64
    %v489 = vpop.permute.xlu0 %488
    %490 = vrot.lane.b32.xlu0 %v447, 64
    %v491 = vpop.permute.xlu0 %490
    %500 = vrot.lane.b32.xlu0 %v448, 96
    %v501 = vpop.permute.xlu0 %500
    %502 = vrot.lane.b32.xlu0 %v449, 96
    %v503 = vpop.permute.xlu0 %502
    %504 = vrot.lane.b32.xlu0 %v450, 96
    %v505 = vpop.permute.xlu0 %504
    %506 = vrot.lane.b32.xlu0 %v451, 96
    %v507 = vpop.permute.xlu0 %506
    %516 = vrot.lane.b32.xlu0 %v460, 32
    %v517 = vpop.permute.xlu0 %516
    %518 = vrot.lane.b32.xlu0 %v461, 32
    %v519 = vpop.permute.xlu0 %518
    %520 = vrot.lane.b32.xlu0 %v462, 32
    %v521 = vpop.permute.xlu0 %520
    %522 = vrot.lane.b32.xlu0 %v463, 32
    %v523 = vpop.permute.xlu0 %522
    %v528 = vsel %vm35, %v436, %v469
    %v529 = vsel %vm35, %v437, %v471
    %v530 = vsel %vm35, %v438, %v473
    %v531 = vsel %vm35, %v439, %v475
    %v532 = vsel %vm262, %v528, %v485
    %v533 = vsel %vm262, %v529, %v487
    %v534 = vsel %vm262, %v530, %v489
    %v535 = vsel %vm262, %v531, %v491
    %v536 = vsel %vm267, %v532, %v501
    %v537 = vsel %vm267, %v533, %v503
    %v538 = vsel %vm267, %v534, %v505
    %v539 = vsel %vm267, %v535, %v507
    %v540 = vsel %vm35, %v452, %v517
    %v541 = vsel %vm35, %v453, %v519
    %v542 = vsel %vm35, %v454, %v521
    %v543 = vsel %vm35, %v455, %v523
    %v544 = vpack.c.bf16 %v537, %v536
    %v545 = vpack.c.bf16 %v541, %v540
    %v546 = vpack.c.bf16 %v539, %v538
    %v547 = vpack.c.bf16 %v543, %v542
    %v548 = vld [vmem:[%s4] sm:$0xf]
    %v549 = vld [vmem:[%s4 + $0x4] sm:$0xf]
    %v550 = vld [vmem:[%s4 + $0x8] sm:$0xf]
    %v551 = vld [vmem:[%s4 + $0xc] sm:$0xf]
    %v552 = vld [vmem:[%s4 + $0x10] sm:$0xf]
    %v553 = vld [vmem:[%s4 + $0x14] sm:$0xf]
    %v554 = vld [vmem:[%s4 + $0x18] sm:$0xf]
    %v555 = vld [vmem:[%s4 + $0x1c] sm:$0xf]
    %v556 = vld [vmem:[%s4 + $0x20] sm:$0xf]
    %v557 = vld [vmem:[%s4 + $0x24] sm:$0xf]
    %v558 = vld [vmem:[%s4 + $0x28] sm:$0xf]
    %v559 = vld [vmem:[%s4 + $0x2c] sm:$0xf]
    %v560 = vld [vmem:[%s4 + $0x30] sm:$0xf]
    %v561 = vld [vmem:[%s4 + $0x34] sm:$0xf]
    %v562 = vld [vmem:[%s4 + $0x38] sm:$0xf]
    %v563 = vld [vmem:[%s4 + $0x3c] sm:$0xf]
    %v564 = vld [vmem:[%s4 + $0x40] sm:$0xf]
    %v565 = vld [vmem:[%s4 + $0x44] sm:$0xf]
    %v566 = vld [vmem:[%s4 + $0x48] sm:$0xf]
    %v567 = vld [vmem:[%s4 + $0x4c] sm:$0xf]
    %v568 = vld [vmem:[%s4 + $0x50] sm:$0xf]
    %v569 = vld [vmem:[%s4 + $0x54] sm:$0xf]
    %v570 = vld [vmem:[%s4 + $0x58] sm:$0xf]
    %v571 = vld [vmem:[%s4 + $0x5c] sm:$0xf]
    %v572 = vld [vmem:[%s5] sm:$0x1]
    %v574 = vperm.slane %v572, 0
    %v600 = vunpack.c.l.b16 %v548
    %v601 = vunpack.c.l.b16 %v549
    %v602 = vunpack.c.l.b16 %v550
    %v603 = vunpack.c.l.b16 %v551
    %v604 = vunpack.c.l.b16 %v552
    %v605 = vunpack.c.l.b16 %v553
    %v606 = vunpack.c.l.b16 %v554
    %v607 = vunpack.c.l.b16 %v555
    %v608 = vunpack.c.l.b16 %v556
    %v609 = vunpack.c.l.b16 %v557
    %v610 = vunpack.c.l.b16 %v558
    %v611 = vunpack.c.l.b16 %v559
    %v612 = vunpack.c.l.b16 %v560
    %v613 = vunpack.c.l.b16 %v561
    %v614 = vunpack.c.l.b16 %v562
    %v615 = vunpack.c.l.b16 %v563
    %v616 = vunpack.c.l.b16 %v564
    %v617 = vunpack.c.l.b16 %v565
    %v618 = vunpack.c.l.b16 %v566
    %v619 = vunpack.c.l.b16 %v567
    %v620 = vunpack.c.l.b16 %v568
    %v621 = vunpack.c.l.b16 %v569
    %v622 = vunpack.c.l.b16 %v570
    %v623 = vunpack.c.l.b16 %v571
    %v624 = vpack.c.b16 %v601, %v600
    %v625 = vpack.c.b16 %v603, %v602
    %v626 = vpack.c.b16 %v605, %v604
    %v627 = vpack.c.b16 %v607, %v606
    %v628 = vpack.c.b16 %v609, %v608
    %v629 = vpack.c.b16 %v611, %v610
    %v630 = vpack.c.b16 %v613, %v612
    %v631 = vpack.c.b16 %v615, %v614
    %v632 = vpack.c.b16 %v617, %v616
    %v633 = vpack.c.b16 %v619, %v618
    %v634 = vpack.c.b16 %v621, %v620
    %v635 = vpack.c.b16 %v623, %v622
    %v649 = vsel %vm262, %v545, 0
    %v652 = vsel %vm262, %v547, 0
    %654 = vmatpush.bf16.msra.mxu0 %v631
    %655 = vmatpush.bf16.msra.mxu0 %v630
    %656 = vmatpush.bf16.msra.mxu0 %v629
    %657 = vmatpush.bf16.msra.mxu0 %v628
    %658 = vmatpush.bf16.msra.mxu0 %v627
    %659 = vmatpush.bf16.msra.mxu0 %v626
    %660 = vmatpush.bf16.msra.mxu0 %v625
    %661 = vmatpush.bf16.msra.mxu0 %v624
    %662 = vmatmul.bf16.gmra.mxu0 %v544
    %v663 = vpop.f32.mrf.mxu0
    %v664 = vadd.f32 %v574, %v663
    %v665 = vpop.f32.mrf.mxu0
    %v666 = vadd.f32 %v574, %v665
    %667 = vmatmul.bf16.gmra.mxu0 %v546
    %v668 = vpop.f32.mrf.mxu0
    %v669 = vadd.f32 %v574, %v668
    %v670 = vpop.f32.mrf.mxu0
    %v671 = vadd.f32 %v574, %v670
    %672 = vdwg.mxu0
    %673 = vmatpush.bf16.msra.mxu0 0
    %674 = vmatpush.bf16.msra.mxu0 0
    %675 = vmatpush.bf16.msra.mxu0 0
    %676 = vmatpush.bf16.msra.mxu0 0
    %677 = vmatpush.bf16.msra.mxu0 %v635
    %678 = vmatpush.bf16.msra.mxu0 %v634
    %679 = vmatpush.bf16.msra.mxu0 %v633
    %680 = vmatpush.bf16.msra.mxu0 %v632
    %681 = vmatmul.bf16.gmra.mxu0 %v649
    %v682 = vpop.f32.mrf.mxu0
    %v683 = vadd.f32 %v664, %v682
    %v684 = vpop.f32.mrf.mxu0
    %v685 = vadd.f32 %v666, %v684
    %686 = vmatmul.bf16.gmra.mxu0 %v652
    %v687 = vpop.f32.mrf.mxu0
    %v688 = vadd.f32 %v669, %v687
    %v689 = vpop.f32.mrf.mxu0
    %v690 = vadd.f32 %v671, %v689
    %691 = vdwg.mxu0
    %v692 = vsel %vm154, %v683, 0.0
    %v693 = vsel %vm155, %v685, 0.0
    %v694 = vsel %vm156, %v688, 0.0
    %v695 = vsel %vm157, %v690, 0.0
    %696 = vst.msk [vmem:[#allocation2 + $0x8] sm:$0xff] %vm35, %v692
    %697 = vst.msk [vmem:[#allocation2 + $0x10] sm:$0xff] %vm35, %v693
    %698 = vst.msk [vmem:[#allocation2 + $0x18] sm:$0xff] %vm35, %v694
    %699 = vst.msk [vmem:[#allocation2 + $0x20] sm:$0xff] %vm35, %v695
    %s700 = scalar_lea.vmem [#allocation2], 8
    %v701 = vld [vmem:[%s700] ss:$2 sm:$0x3f]
    %s702 = scalar_lea.vmem [#allocation2], 9
    %v703 = vld [vmem:[%s702] ss:$2 sm:$0x3f]
    %s704 = scalar_lea.vmem [#allocation2], 10
    %v705 = vld [vmem:[%s704] ss:$2 sm:$0x3f]
    %v706 = vmax.f32 %v701, %v703
    %v707 = vmax.f32 %v706, %v705
    %vm708 = vcmask 259072
    %709 = vst.msk [vmem:[#allocation3] sm:$0x3f] %vm708, %v707
    %s710 = scalar_lea.vmem [#allocation2], 24
    %v711 = vld [vmem:[%s710] ss:$2 sm:$0x3f]
    %s712 = scalar_lea.vmem [#allocation2], 25
    %v713 = vld [vmem:[%s712] ss:$2 sm:$0x3f]
    %s714 = scalar_lea.vmem [#allocation2], 26
    %v715 = vld [vmem:[%s714] ss:$2 sm:$0x3f]
    %v716 = vmax.f32 %v711, %v713
    %v717 = vmax.f32 %v716, %v715
    %718 = vst.msk [vmem:[#allocation3 + $0x10] sm:$0x3f] %vm708, %v717
    %v719 = vld [vmem:[#allocation3] sm:$0xff]
    %v720 = vld [vmem:[#allocation3 + $0x8] sm:$0xff]
    %v721 = vld [vmem:[#allocation3 + $0x10] sm:$0xff]
    %v722 = vld [vmem:[#allocation3 + $0x18] sm:$0xff]
    %vm723 = vcmp.lt.s32.totalorder %v31, 6
    %vm724 = vcmp.lt.s32.totalorder %v32, 6
    %vm725 = vcmp.lt.s32.totalorder %v33, 6
    %vm726 = vcmp.lt.s32.totalorder %v34, 6
    %v727 = vmax.f32 %v719, 0.0
    %v728 = vmax.f32 %v720, 0.0
    %v729 = vmax.f32 %v721, 0.0
    %v730 = vmax.f32 %v722, 0.0
    %v731 = vsel %vm723, 1, 0
    %v732 = vsel %vm724, 1, 0
    %v733 = vsel %vm725, 1, 0
    %v734 = vsel %vm726, 1, 0
    %735 = vset.pattern.permute.xlu0 0
    %736 = vperm.xlu0 %735, %v731
    %v737 = vpop.permute.xlu0 %736
    %738 = vset.pattern.permute.xlu0 0
    %739 = vperm.xlu0 %738, %v732
    %v740 = vpop.permute.xlu0 %739
    %741 = vset.pattern.permute.xlu0 0
    %742 = vperm.xlu0 %741, %v733
    %v743 = vpop.permute.xlu0 %742
    %744 = vset.pattern.permute.xlu0 0
    %745 = vperm.xlu0 %744, %v734
    %v746 = vpop.permute.xlu0 %745
    %vm747 = vcmp.eq.s32.totalorder %v737, 1
    %vm748 = vcmp.eq.s32.totalorder %v740, 1
    %vm749 = vcmp.eq.s32.totalorder %v743, 1
    %vm750 = vcmp.eq.s32.totalorder %v746, 1
    %v751 = vsel %vm747, %v727, 0.0
    %v752 = vsel %vm748, %v728, 0.0
    %v753 = vsel %vm749, %v729, 0.0
    %v754 = vsel %vm750, %v730, 0.0
    %755 = vst.msk [vmem:[#allocation2 + $0x8] sm:$0xff] %vm35, %v751
    %756 = vst.msk [vmem:[#allocation2 + $0x10] sm:$0xff] %vm35, %v752
    %757 = vst.msk [vmem:[#allocation2 + $0x18] sm:$0xff] %vm35, %v753
    %758 = vst.msk [vmem:[#allocation2 + $0x20] sm:$0xff] %vm35, %v754
    %v759 = vld [vmem:[#allocation2 + $0x6] sm:$0xff]
    %v760 = vld [vmem:[#allocation2 + $0xe] sm:$0xff]
    %v761 = vld [vmem:[#allocation2 + $0x16] sm:$0xff]
    %v762 = vld [vmem:[#allocation2 + $0x1e] sm:$0xff]
    %v763 = vld [vmem:[#allocation2 + $0x7] sm:$0xff]
    %v764 = vld [vmem:[#allocation2 + $0xf] sm:$0xff]
    %v765 = vld [vmem:[#allocation2 + $0x17] sm:$0xff]
    %v766 = vld [vmem:[#allocation2 + $0x1f] sm:$0xff]
    %v767 = vld [vmem:[#allocation2 + $0x8] sm:$0xff]
    %v768 = vld [vmem:[#allocation2 + $0x10] sm:$0xff]
    %v769 = vld [vmem:[#allocation2 + $0x18] sm:$0xff]
    %v770 = vld [vmem:[#allocation2 + $0x20] sm:$0xff]
    %v771 = vld [vmem:[#allocation2 + $0x9] sm:$0xff]
    %v772 = vld [vmem:[#allocation2 + $0x11] sm:$0xff]
    %v773 = vld [vmem:[#allocation2 + $0x19] sm:$0xff]
    %v774 = vld [vmem:[#allocation2 + $0x21] sm:$0xff]
    %v775 = vld [vmem:[#allocation2 + $0xa] sm:$0xff]
    %v776 = vld [vmem:[#allocation2 + $0x12] sm:$0xff]
    %v777 = vld [vmem:[#allocation2 + $0x1a] sm:$0xff]
    %v778 = vld [vmem:[#allocation2 + $0x22] sm:$0xff]
    %v779 = vmax.f32 %v763, %v767
    %v780 = vmax.f32 %v764, %v768
    %v781 = vmax.f32 %v765, %v769
    %v782 = vmax.f32 %v766, %v770
    %v783 = vmax.f32 %v779, %v771
    %v784 = vmax.f32 %v780, %v772
    %v785 = vmax.f32 %v781, %v773
    %v786 = vmax.f32 %v782, %v774
    %791 = vrot.lane.b32.xlu0 %v763, 32
    %v792 = vpop.permute.xlu0 %791
    %793 = vrot.lane.b32.xlu0 %v764, 32
    %v794 = vpop.permute.xlu0 %793
    %795 = vrot.lane.b32.xlu0 %v765, 32
    %v796 = vpop.permute.xlu0 %795
    %797 = vrot.lane.b32.xlu0 %v766, 32
    %v798 = vpop.permute.xlu0 %797
    %807 = vrot.lane.b32.xlu0 %v767, 64
    %v808 = vpop.permute.xlu0 %807
    %809 = vrot.lane.b32.xlu0 %v768, 64
    %v810 = vpop.permute.xlu0 %809
    %811 = vrot.lane.b32.xlu0 %v769, 64
    %v812 = vpop.permute.xlu0 %811
    %813 = vrot.lane.b32.xlu0 %v770, 64
    %v814 = vpop.permute.xlu0 %813
    %823 = vrot.lane.b32.xlu0 %v771, 96
    %v824 = vpop.permute.xlu0 %823
    %825 = vrot.lane.b32.xlu0 %v772, 96
    %v826 = vpop.permute.xlu0 %825
    %827 = vrot.lane.b32.xlu0 %v773, 96
    %v828 = vpop.permute.xlu0 %827
    %829 = vrot.lane.b32.xlu0 %v774, 96
    %v830 = vpop.permute.xlu0 %829
    %839 = vrot.lane.b32.xlu0 %v783, 32
    %v840 = vpop.permute.xlu0 %839
    %841 = vrot.lane.b32.xlu0 %v784, 32
    %v842 = vpop.permute.xlu0 %841
    %843 = vrot.lane.b32.xlu0 %v785, 32
    %v844 = vpop.permute.xlu0 %843
    %845 = vrot.lane.b32.xlu0 %v786, 32
    %v846 = vpop.permute.xlu0 %845
    %v851 = vsel %vm35, %v759, %v792
    %v852 = vsel %vm35, %v760, %v794
    %v853 = vsel %vm35, %v761, %v796
    %v854 = vsel %vm35, %v762, %v798
    %v855 = vsel %vm262, %v851, %v808
    %v856 = vsel %vm262, %v852, %v810
    %v857 = vsel %vm262, %v853, %v812
    %v858 = vsel %vm262, %v854, %v814
    %v859 = vsel %vm267, %v855, %v824
    %v860 = vsel %vm267, %v856, %v826
    %v861 = vsel %vm267, %v857, %v828
    %v862 = vsel %vm267, %v858, %v830
    %v863 = vsel %vm35, %v775, %v840
    %v864 = vsel %vm35, %v776, %v842
    %v865 = vsel %vm35, %v777, %v844
    %v866 = vsel %vm35, %v778, %v846
    %v867 = vpack.c.bf16 %v860, %v859
    %v868 = vpack.c.bf16 %v864, %v863
    %v869 = vpack.c.bf16 %v862, %v861
    %v870 = vpack.c.bf16 %v866, %v865
    %v871 = vld [vmem:[%s4] sm:$0xf]
    %v872 = vld [vmem:[%s4 + $0x4] sm:$0xf]
    %v873 = vld [vmem:[%s4 + $0x8] sm:$0xf]
    %v874 = vld [vmem:[%s4 + $0xc] sm:$0xf]
    %v875 = vld [vmem:[%s4 + $0x10] sm:$0xf]
    %v876 = vld [vmem:[%s4 + $0x14] sm:$0xf]
    %v877 = vld [vmem:[%s4 + $0x18] sm:$0xf]
    %v878 = vld [vmem:[%s4 + $0x1c] sm:$0xf]
    %v879 = vld [vmem:[%s4 + $0x20] sm:$0xf]
    %v880 = vld [vmem:[%s4 + $0x24] sm:$0xf]
    %v881 = vld [vmem:[%s4 + $0x28] sm:$0xf]
    %v882 = vld [vmem:[%s4 + $0x2c] sm:$0xf]
    %v883 = vld [vmem:[%s4 + $0x30] sm:$0xf]
    %v884 = vld [vmem:[%s4 + $0x34] sm:$0xf]
    %v885 = vld [vmem:[%s4 + $0x38] sm:$0xf]
    %v886 = vld [vmem:[%s4 + $0x3c] sm:$0xf]
    %v887 = vld [vmem:[%s4 + $0x40] sm:$0xf]
    %v888 = vld [vmem:[%s4 + $0x44] sm:$0xf]
    %v889 = vld [vmem:[%s4 + $0x48] sm:$0xf]
    %v890 = vld [vmem:[%s4 + $0x4c] sm:$0xf]
    %v891 = vld [vmem:[%s4 + $0x50] sm:$0xf]
    %v892 = vld [vmem:[%s4 + $0x54] sm:$0xf]
    %v893 = vld [vmem:[%s4 + $0x58] sm:$0xf]
    %v894 = vld [vmem:[%s4 + $0x5c] sm:$0xf]
    %v895 = vld [vmem:[%s5] sm:$0x1]
    %v897 = vperm.slane %v895, 0
    %v923 = vunpack.c.l.b16 %v871
    %v924 = vunpack.c.l.b16 %v872
    %v925 = vunpack.c.l.b16 %v873
    %v926 = vunpack.c.l.b16 %v874
    %v927 = vunpack.c.l.b16 %v875
    %v928 = vunpack.c.l.b16 %v876
    %v929 = vunpack.c.l.b16 %v877
    %v930 = vunpack.c.l.b16 %v878
    %v931 = vunpack.c.l.b16 %v879
    %v932 = vunpack.c.l.b16 %v880
    %v933 = vunpack.c.l.b16 %v881
    %v934 = vunpack.c.l.b16 %v882
    %v935 = vunpack.c.l.b16 %v883
    %v936 = vunpack.c.l.b16 %v884
    %v937 = vunpack.c.l.b16 %v885
    %v938 = vunpack.c.l.b16 %v886
    %v939 = vunpack.c.l.b16 %v887
    %v940 = vunpack.c.l.b16 %v888
    %v941 = vunpack.c.l.b16 %v889
    %v942 = vunpack.c.l.b16 %v890
    %v943 = vunpack.c.l.b16 %v891
    %v944 = vunpack.c.l.b16 %v892
    %v945 = vunpack.c.l.b16 %v893
    %v946 = vunpack.c.l.b16 %v894
    %v947 = vpack.c.b16 %v924, %v923
    %v948 = vpack.c.b16 %v926, %v925
    %v949 = vpack.c.b16 %v928, %v927
    %v950 = vpack.c.b16 %v930, %v929
    %v951 = vpack.c.b16 %v932, %v931
    %v952 = vpack.c.b16 %v934, %v933
    %v953 = vpack.c.b16 %v936, %v935
    %v954 = vpack.c.b16 %v938, %v937
    %v955 = vpack.c.b16 %v940, %v939
    %v956 = vpack.c.b16 %v942, %v941
    %v957 = vpack.c.b16 %v944, %v943
    %v958 = vpack.c.b16 %v946, %v945
    %v972 = vsel %vm262, %v868, 0
    %v975 = vsel %vm262, %v870, 0
    %977 = vmatpush.bf16.msra.mxu0 %v954
    %978 = vmatpush.bf16.msra.mxu0 %v953
    %979 = vmatpush.bf16.msra.mxu0 %v952
    %980 = vmatpush.bf16.msra.mxu0 %v951
    %981 = vmatpush.bf16.msra.mxu0 %v950
    %982 = vmatpush.bf16.msra.mxu0 %v949
    %983 = vmatpush.bf16.msra.mxu0 %v948
    %984 = vmatpush.bf16.msra.mxu0 %v947
    %985 = vmatmul.bf16.gmra.mxu0 %v867
    %v986 = vpop.f32.mrf.mxu0
    %v987 = vadd.f32 %v897, %v986
    %v988 = vpop.f32.mrf.mxu0
    %v989 = vadd.f32 %v897, %v988
    %990 = vmatmul.bf16.gmra.mxu0 %v869
    %v991 = vpop.f32.mrf.mxu0
    %v992 = vadd.f32 %v897, %v991
    %v993 = vpop.f32.mrf.mxu0
    %v994 = vadd.f32 %v897, %v993
    %995 = vdwg.mxu0
    %996 = vmatpush.bf16.msra.mxu0 0
    %997 = vmatpush.bf16.msra.mxu0 0
    %998 = vmatpush.bf16.msra.mxu0 0
    %999 = vmatpush.bf16.msra.mxu0 0
    %1000 = vmatpush.bf16.msra.mxu0 %v958
    %1001 = vmatpush.bf16.msra.mxu0 %v957
    %1002 = vmatpush.bf16.msra.mxu0 %v956
    %1003 = vmatpush.bf16.msra.mxu0 %v955
    %1004 = vmatmul.bf16.gmra.mxu0 %v972
    %v1005 = vpop.f32.mrf.mxu0
    %v1006 = vadd.f32 %v987, %v1005
    %v1007 = vpop.f32.mrf.mxu0
    %v1008 = vadd.f32 %v989, %v1007
    %1009 = vmatmul.bf16.gmra.mxu0 %v975
    %v1010 = vpop.f32.mrf.mxu0
    %v1011 = vadd.f32 %v992, %v1010
    %v1012 = vpop.f32.mrf.mxu0
    %v1013 = vadd.f32 %v994, %v1012
    %1014 = vdwg.mxu0
    %v1015 = vmax.f32 %v1006, 0.0
    %v1016 = vmax.f32 %v1008, 0.0
    %v1017 = vmax.f32 %v1011, 0.0
    %v1018 = vmax.f32 %v1013, 0.0
    %v1019 = vsel %vm747, %v1015, 0.0
    %v1020 = vsel %vm748, %v1016, 0.0
    %v1021 = vsel %vm749, %v1017, 0.0
    %v1022 = vsel %vm750, %v1018, 0.0
    %1023 = vst.msk [vmem:[#allocation2 + $0x8] sm:$0xff] %vm35, %v1019
    %1024 = vst.msk [vmem:[#allocation2 + $0x10] sm:$0xff] %vm35, %v1020
    %1025 = vst.msk [vmem:[#allocation2 + $0x18] sm:$0xff] %vm35, %v1021
    %1026 = vst.msk [vmem:[#allocation2 + $0x20] sm:$0xff] %vm35, %v1022
    %v1027 = vld [vmem:[#allocation2 + $0x6] sm:$0xff]
    %v1028 = vld [vmem:[#allocation2 + $0xe] sm:$0xff]
    %v1029 = vld [vmem:[#allocation2 + $0x16] sm:$0xff]
    %v1030 = vld [vmem:[#allocation2 + $0x1e] sm:$0xff]
    %v1031 = vld [vmem:[#allocation2 + $0x7] sm:$0xff]
    %v1032 = vld [vmem:[#allocation2 + $0xf] sm:$0xff]
    %v1033 = vld [vmem:[#allocation2 + $0x17] sm:$0xff]
    %v1034 = vld [vmem:[#allocation2 + $0x1f] sm:$0xff]
    %v1035 = vld [vmem:[#allocation2 + $0x8] sm:$0xff]
    %v1036 = vld [vmem:[#allocation2 + $0x10] sm:$0xff]
    %v1037 = vld [vmem:[#allocation2 + $0x18] sm:$0xff]
    %v1038 = vld [vmem:[#allocation2 + $0x20] sm:$0xff]
    %v1039 = vld [vmem:[#allocation2 + $0x9] sm:$0xff]
    %v1040 = vld [vmem:[#allocation2 + $0x11] sm:$0xff]
    %v1041 = vld [vmem:[#allocation2 + $0x19] sm:$0xff]
    %v1042 = vld [vmem:[#allocation2 + $0x21] sm:$0xff]
    %v1043 = vld [vmem:[#allocation2 + $0xa] sm:$0xff]
    %v1044 = vld [vmem:[#allocation2 + $0x12] sm:$0xff]
    %v1045 = vld [vmem:[#allocation2 + $0x1a] sm:$0xff]
    %v1046 = vld [vmem:[#allocation2 + $0x22] sm:$0xff]
    %v1047 = vmax.f32 %v1031, %v1035
    %v1048 = vmax.f32 %v1032, %v1036
    %v1049 = vmax.f32 %v1033, %v1037
    %v1050 = vmax.f32 %v1034, %v1038
    %v1051 = vmax.f32 %v1047, %v1039
    %v1052 = vmax.f32 %v1048, %v1040
    %v1053 = vmax.f32 %v1049, %v1041
    %v1054 = vmax.f32 %v1050, %v1042
    %1059 = vrot.lane.b32.xlu0 %v1031, 32
    %v1060 = vpop.permute.xlu0 %1059
    %1061 = vrot.lane.b32.xlu0 %v1032, 32
    %v1062 = vpop.permute.xlu0 %1061
    %1063 = vrot.lane.b32.xlu0 %v1033, 32
    %v1064 = vpop.permute.xlu0 %1063
    %1065 = vrot.lane.b32.xlu0 %v1034, 32
    %v1066 = vpop.permute.xlu0 %1065
    %1075 = vrot.lane.b32.xlu0 %v1035, 64
    %v1076 = vpop.permute.xlu0 %1075
    %1077 = vrot.lane.b32.xlu0 %v1036, 64
    %v1078 = vpop.permute.xlu0 %1077
    %1079 = vrot.lane.b32.xlu0 %v1037, 64
    %v1080 = vpop.permute.xlu0 %1079
    %1081 = vrot.lane.b32.xlu0 %v1038, 64
    %v1082 = vpop.permute.xlu0 %1081
    %1091 = vrot.lane.b32.xlu0 %v1039, 96
    %v1092 = vpop.permute.xlu0 %1091
    %1093 = vrot.lane.b32.xlu0 %v1040, 96
    %v1094 = vpop.permute.xlu0 %1093
    %1095 = vrot.lane.b32.xlu0 %v1041, 96
    %v1096 = vpop.permute.xlu0 %1095
    %1097 = vrot.lane.b32.xlu0 %v1042, 96
    %v1098 = vpop.permute.xlu0 %1097
    %1107 = vrot.lane.b32.xlu0 %v1051, 32
    %v1108 = vpop.permute.xlu0 %1107
    %1109 = vrot.lane.b32.xlu0 %v1052, 32
    %v1110 = vpop.permute.xlu0 %1109
    %1111 = vrot.lane.b32.xlu0 %v1053, 32
    %v1112 = vpop.permute.xlu0 %1111
    %1113 = vrot.lane.b32.xlu0 %v1054, 32
    %v1114 = vpop.permute.xlu0 %1113
    %v1119 = vsel %vm35, %v1027, %v1060
    %v1120 = vsel %vm35, %v1028, %v1062
    %v1121 = vsel %vm35, %v1029, %v1064
    %v1122 = vsel %vm35, %v1030, %v1066
    %v1123 = vsel %vm262, %v1119, %v1076
    %v1124 = vsel %vm262, %v1120, %v1078
    %v1125 = vsel %vm262, %v1121, %v1080
    %v1126 = vsel %vm262, %v1122, %v1082
    %v1127 = vsel %vm267, %v1123, %v1092
    %v1128 = vsel %vm267, %v1124, %v1094
    %v1129 = vsel %vm267, %v1125, %v1096
    %v1130 = vsel %vm267, %v1126, %v1098
    %v1131 = vsel %vm35, %v1043, %v1108
    %v1132 = vsel %vm35, %v1044, %v1110
    %v1133 = vsel %vm35, %v1045, %v1112
    %v1134 = vsel %vm35, %v1046, %v1114
    %v1135 = vpack.c.bf16 %v1128, %v1127
    %v1136 = vpack.c.bf16 %v1132, %v1131
    %v1137 = vpack.c.bf16 %v1130, %v1129
    %v1138 = vpack.c.bf16 %v1134, %v1133
    %v1139 = vld [vmem:[%s4] sm:$0xf]
    %v1140 = vld [vmem:[%s4 + $0x4] sm:$0xf]
    %v1141 = vld [vmem:[%s4 + $0x8] sm:$0xf]
    %v1142 = vld [vmem:[%s4 + $0xc] sm:$0xf]
    %v1143 = vld [vmem:[%s4 + $0x10] sm:$0xf]
    %v1144 = vld [vmem:[%s4 + $0x14] sm:$0xf]
    %v1145 = vld [vmem:[%s4 + $0x18] sm:$0xf]
    %v1146 = vld [vmem:[%s4 + $0x1c] sm:$0xf]
    %v1147 = vld [vmem:[%s4 + $0x20] sm:$0xf]
    %v1148 = vld [vmem:[%s4 + $0x24] sm:$0xf]
    %v1149 = vld [vmem:[%s4 + $0x28] sm:$0xf]
    %v1150 = vld [vmem:[%s4 + $0x2c] sm:$0xf]
    %v1151 = vld [vmem:[%s4 + $0x30] sm:$0xf]
    %v1152 = vld [vmem:[%s4 + $0x34] sm:$0xf]
    %v1153 = vld [vmem:[%s4 + $0x38] sm:$0xf]
    %v1154 = vld [vmem:[%s4 + $0x3c] sm:$0xf]
    %v1155 = vld [vmem:[%s4 + $0x40] sm:$0xf]
    %v1156 = vld [vmem:[%s4 + $0x44] sm:$0xf]
    %v1157 = vld [vmem:[%s4 + $0x48] sm:$0xf]
    %v1158 = vld [vmem:[%s4 + $0x4c] sm:$0xf]
    %v1159 = vld [vmem:[%s4 + $0x50] sm:$0xf]
    %v1160 = vld [vmem:[%s4 + $0x54] sm:$0xf]
    %v1161 = vld [vmem:[%s4 + $0x58] sm:$0xf]
    %v1162 = vld [vmem:[%s4 + $0x5c] sm:$0xf]
    %v1163 = vld [vmem:[%s5] sm:$0x1]
    %v1165 = vperm.slane %v1163, 0
    %v1191 = vunpack.c.l.b16 %v1139
    %v1192 = vunpack.c.l.b16 %v1140
    %v1193 = vunpack.c.l.b16 %v1141
    %v1194 = vunpack.c.l.b16 %v1142
    %v1195 = vunpack.c.l.b16 %v1143
    %v1196 = vunpack.c.l.b16 %v1144
    %v1197 = vunpack.c.l.b16 %v1145
    %v1198 = vunpack.c.l.b16 %v1146
    %v1199 = vunpack.c.l.b16 %v1147
    %v1200 = vunpack.c.l.b16 %v1148
    %v1201 = vunpack.c.l.b16 %v1149
    %v1202 = vunpack.c.l.b16 %v1150
    %v1203 = vunpack.c.l.b16 %v1151
    %v1204 = vunpack.c.l.b16 %v1152
    %v1205 = vunpack.c.l.b16 %v1153
    %v1206 = vunpack.c.l.b16 %v1154
    %v1207 = vunpack.c.l.b16 %v1155
    %v1208 = vunpack.c.l.b16 %v1156
    %v1209 = vunpack.c.l.b16 %v1157
    %v1210 = vunpack.c.l.b16 %v1158
    %v1211 = vunpack.c.l.b16 %v1159
    %v1212 = vunpack.c.l.b16 %v1160
    %v1213 = vunpack.c.l.b16 %v1161
    %v1214 = vunpack.c.l.b16 %v1162
    %v1215 = vpack.c.b16 %v1192, %v1191
    %v1216 = vpack.c.b16 %v1194, %v1193
    %v1217 = vpack.c.b16 %v1196, %v1195
    %v1218 = vpack.c.b16 %v1198, %v1197
    %v1219 = vpack.c.b16 %v1200, %v1199
    %v1220 = vpack.c.b16 %v1202, %v1201
    %v1221 = vpack.c.b16 %v1204, %v1203
    %v1222 = vpack.c.b16 %v1206, %v1205
    %v1223 = vpack.c.b16 %v1208, %v1207
    %v1224 = vpack.c.b16 %v1210, %v1209
    %v1225 = vpack.c.b16 %v1212, %v1211
    %v1226 = vpack.c.b16 %v1214, %v1213
    %v1240 = vsel %vm262, %v1136, 0
    %v1243 = vsel %vm262, %v1138, 0
    %1245 = vmatpush.bf16.msra.mxu0 %v1222
    %1246 = vmatpush.bf16.msra.mxu0 %v1221
    %1247 = vmatpush.bf16.msra.mxu0 %v1220
    %1248 = vmatpush.bf16.msra.mxu0 %v1219
    %1249 = vmatpush.bf16.msra.mxu0 %v1218
    %1250 = vmatpush.bf16.msra.mxu0 %v1217
    %1251 = vmatpush.bf16.msra.mxu0 %v1216
    %1252 = vmatpush.bf16.msra.mxu0 %v1215
    %1253 = vmatmul.bf16.gmra.mxu0 %v1135
    %v1254 = vpop.f32.mrf.mxu0
    %v1255 = vadd.f32 %v1165, %v1254
    %v1256 = vpop.f32.mrf.mxu0
    %v1257 = vadd.f32 %v1165, %v1256
    %1258 = vmatmul.bf16.gmra.mxu0 %v1137
    %v1259 = vpop.f32.mrf.mxu0
    %v1260 = vadd.f32 %v1165, %v1259
    %v1261 = vpop.f32.mrf.mxu0
    %v1262 = vadd.f32 %v1165, %v1261
    %1263 = vdwg.mxu0
    %1264 = vmatpush.bf16.msra.mxu0 0
    %1265 = vmatpush.bf16.msra.mxu0 0
    %1266 = vmatpush.bf16.msra.mxu0 0
    %1267 = vmatpush.bf16.msra.mxu0 0
    %1268 = vmatpush.bf16.msra.mxu0 %v1226
    %1269 = vmatpush.bf16.msra.mxu0 %v1225
    %1270 = vmatpush.bf16.msra.mxu0 %v1224
    %1271 = vmatpush.bf16.msra.mxu0 %v1223
    %1272 = vmatmul.bf16.gmra.mxu0 %v1240
    %v1273 = vpop.f32.mrf.mxu0
    %v1274 = vadd.f32 %v1255, %v1273
    %v1275 = vpop.f32.mrf.mxu0
    %v1276 = vadd.f32 %v1257, %v1275
    %1277 = vmatmul.bf16.gmra.mxu0 %v1243
    %v1278 = vpop.f32.mrf.mxu0
    %v1279 = vadd.f32 %v1260, %v1278
    %v1280 = vpop.f32.mrf.mxu0
    %v1281 = vadd.f32 %v1262, %v1280
    %1282 = vdwg.mxu0
    %v1283 = vadd.f32 %v1274, %v719
    %v1284 = vadd.f32 %v1276, %v720
    %v1285 = vadd.f32 %v1279, %v721
    %v1286 = vadd.f32 %v1281, %v722
    %v1287 = vsel %vm747, %v1283, 0.0
    %v1288 = vsel %vm748, %v1284, 0.0
    %v1289 = vsel %vm749, %v1285, 0.0
    %v1290 = vsel %vm750, %v1286, 0.0
    %1291 = vst.msk [vmem:[#allocation2 + $0x8] sm:$0xff] %vm35, %v1287
    %1292 = vst.msk [vmem:[#allocation2 + $0x10] sm:$0xff] %vm35, %v1288
    %1293 = vst.msk [vmem:[#allocation2 + $0x18] sm:$0xff] %vm35, %v1289
    %1294 = vst.msk [vmem:[#allocation2 + $0x20] sm:$0xff] %vm35, %v1290
    %v1295 = vld [vmem:[%s700] ss:$2 sm:$0x7]
    %v1296 = vld [vmem:[%s702] ss:$2 sm:$0x7]
    %v1297 = vld [vmem:[%s704] ss:$2 sm:$0x7]
    %v1298 = vmax.f32 %v1295, %v1296
    %v1299 = vmax.f32 %v1298, %v1297
    %vm1300 = vcmask 256000
    %1301 = vst.msk [vmem:[#allocation3] sm:$0x7] %vm1300, %v1299
    %v1302 = vld [vmem:[%s710] ss:$2 sm:$0x7]
    %v1303 = vld [vmem:[%s712] ss:$2 sm:$0x7]
    %v1304 = vld [vmem:[%s714] ss:$2 sm:$0x7]
    %v1305 = vmax.f32 %v1302, %v1303
    %v1306 = vmax.f32 %v1305, %v1304
    %1307 = vst.msk [vmem:[#allocation3 + $0x10] sm:$0x7] %vm1300, %v1306
    %v1308 = vld [vmem:[#allocation3] sm:$0xff]
    %v1309 = vld [vmem:[#allocation3 + $0x8] sm:$0xff]
    %v1310 = vld [vmem:[#allocation3 + $0x10] sm:$0xff]
    %v1311 = vld [vmem:[#allocation3 + $0x18] sm:$0xff]
    %vm1312 = vcmp.lt.s32.totalorder %v31, 3
    %vm1313 = vcmp.lt.s32.totalorder %v32, 3
    %vm1314 = vcmp.lt.s32.totalorder %v33, 3
    %vm1315 = vcmp.lt.s32.totalorder %v34, 3
    %v1316 = vmax.f32 %v1308, 0.0
    %v1317 = vmax.f32 %v1309, 0.0
    %v1318 = vmax.f32 %v1310, 0.0
    %v1319 = vmax.f32 %v1311, 0.0
    %v1320 = vsel %vm1312, 1, 0
    %v1321 = vsel %vm1313, 1, 0
    %v1322 = vsel %vm1314, 1, 0
    %v1323 = vsel %vm1315, 1, 0
    %1324 = vset.pattern.permute.xlu0 0
    %1325 = vperm.xlu0 %1324, %v1320
    %v1326 = vpop.permute.xlu0 %1325
    %1327 = vset.pattern.permute.xlu0 0
    %1328 = vperm.xlu0 %1327, %v1321
    %v1329 = vpop.permute.xlu0 %1328
    %1330 = vset.pattern.permute.xlu0 0
    %1331 = vperm.xlu0 %1330, %v1322
    %v1332 = vpop.permute.xlu0 %1331
    %1333 = vset.pattern.permute.xlu0 0
    %1334 = vperm.xlu0 %1333, %v1323
    %v1335 = vpop.permute.xlu0 %1334
    %vm1336 = vcmp.eq.s32.totalorder %v1326, 1
    %vm1337 = vcmp.eq.s32.totalorder %v1329, 1
    %vm1338 = vcmp.eq.s32.totalorder %v1332, 1
    %vm1339 = vcmp.eq.s32.totalorder %v1335, 1
    %v1340 = vsel %vm1336, %v1316, 0.0
    %v1341 = vsel %vm1337, %v1317, 0.0
    %v1342 = vsel %vm1338, %v1318, 0.0
    %v1343 = vsel %vm1339, %v1319, 0.0
    %1344 = vst.msk [vmem:[#allocation2 + $0x8] sm:$0xff] %vm35, %v1340
    %1345 = vst.msk [vmem:[#allocation2 + $0x10] sm:$0xff] %vm35, %v1341
    %1346 = vst.msk [vmem:[#allocation2 + $0x18] sm:$0xff] %vm35, %v1342
    %1347 = vst.msk [vmem:[#allocation2 + $0x20] sm:$0xff] %vm35, %v1343
    %v1348 = vld [vmem:[#allocation2 + $0x6] sm:$0xff]
    %v1349 = vld [vmem:[#allocation2 + $0xe] sm:$0xff]
    %v1350 = vld [vmem:[#allocation2 + $0x16] sm:$0xff]
    %v1351 = vld [vmem:[#allocation2 + $0x1e] sm:$0xff]
    %v1352 = vld [vmem:[#allocation2 + $0x7] sm:$0xff]
    %v1353 = vld [vmem:[#allocation2 + $0xf] sm:$0xff]
    %v1354 = vld [vmem:[#allocation2 + $0x17] sm:$0xff]
    %v1355 = vld [vmem:[#allocation2 + $0x1f] sm:$0xff]
    %v1356 = vld [vmem:[#allocation2 + $0x8] sm:$0xff]
    %v1357 = vld [vmem:[#allocation2 + $0x10] sm:$0xff]
    %v1358 = vld [vmem:[#allocation2 + $0x18] sm:$0xff]
    %v1359 = vld [vmem:[#allocation2 + $0x20] sm:$0xff]
    %v1360 = vld [vmem:[#allocation2 + $0x9] sm:$0xff]
    %v1361 = vld [vmem:[#allocation2 + $0x11] sm:$0xff]
    %v1362 = vld [vmem:[#allocation2 + $0x19] sm:$0xff]
    %v1363 = vld [vmem:[#allocation2 + $0x21] sm:$0xff]
    %v1364 = vld [vmem:[#allocation2 + $0xa] sm:$0xff]
    %v1365 = vld [vmem:[#allocation2 + $0x12] sm:$0xff]
    %v1366 = vld [vmem:[#allocation2 + $0x1a] sm:$0xff]
    %v1367 = vld [vmem:[#allocation2 + $0x22] sm:$0xff]
    %v1368 = vmax.f32 %v1352, %v1356
    %v1369 = vmax.f32 %v1353, %v1357
    %v1370 = vmax.f32 %v1354, %v1358
    %v1371 = vmax.f32 %v1355, %v1359
    %v1372 = vmax.f32 %v1368, %v1360
    %v1373 = vmax.f32 %v1369, %v1361
    %v1374 = vmax.f32 %v1370, %v1362
    %v1375 = vmax.f32 %v1371, %v1363
    %1380 = vrot.lane.b32.xlu0 %v1352, 32
    %v1381 = vpop.permute.xlu0 %1380
    %1382 = vrot.lane.b32.xlu0 %v1353, 32
    %v1383 = vpop.permute.xlu0 %1382
    %1384 = vrot.lane.b32.xlu0 %v1354, 32
    %v1385 = vpop.permute.xlu0 %1384
    %1386 = vrot.lane.b32.xlu0 %v1355, 32
    %v1387 = vpop.permute.xlu0 %1386
    %1396 = vrot.lane.b32.xlu0 %v1356, 64
    %v1397 = vpop.permute.xlu0 %1396
    %1398 = vrot.lane.b32.xlu0 %v1357, 64
    %v1399 = vpop.permute.xlu0 %1398
    %1400 = vrot.lane.b32.xlu0 %v1358, 64
    %v1401 = vpop.permute.xlu0 %1400
    %1402 = vrot.lane.b32.xlu0 %v1359, 64
    %v1403 = vpop.permute.xlu0 %1402
    %1412 = vrot.lane.b32.xlu0 %v1360, 96
    %v1413 = vpop.permute.xlu0 %1412
    %1414 = vrot.lane.b32.xlu0 %v1361, 96
    %v1415 = vpop.permute.xlu0 %1414
    %1416 = vrot.lane.b32.xlu0 %v1362, 96
    %v1417 = vpop.permute.xlu0 %1416
    %1418 = vrot.lane.b32.xlu0 %v1363, 96
    %v1419 = vpop.permute.xlu0 %1418
    %1428 = vrot.lane.b32.xlu0 %v1372, 32
    %v1429 = vpop.permute.xlu0 %1428
    %1430 = vrot.lane.b32.xlu0 %v1373, 32
    %v1431 = vpop.permute.xlu0 %1430
    %1432 = vrot.lane.b32.xlu0 %v1374, 32
    %v1433 = vpop.permute.xlu0 %1432
    %1434 = vrot.lane.b32.xlu0 %v1375, 32
    %v1435 = vpop.permute.xlu0 %1434
    %v1440 = vsel %vm35, %v1348, %v1381
    %v1441 = vsel %vm35, %v1349, %v1383
    %v1442 = vsel %vm35, %v1350, %v1385
    %v1443 = vsel %vm35, %v1351, %v1387
    %v1444 = vsel %vm262, %v1440, %v1397
    %v1445 = vsel %vm262, %v1441, %v1399
    %v1446 = vsel %vm262, %v1442, %v1401
    %v1447 = vsel %vm262, %v1443, %v1403
    %v1448 = vsel %vm267, %v1444, %v1413
    %v1449 = vsel %vm267, %v1445, %v1415
    %v1450 = vsel %vm267, %v1446, %v1417
    %v1451 = vsel %vm267, %v1447, %v1419
    %v1452 = vsel %vm35, %v1364, %v1429
    %v1453 = vsel %vm35, %v1365, %v1431
    %v1454 = vsel %vm35, %v1366, %v1433
    %v1455 = vsel %vm35, %v1367, %v1435
    %v1456 = vpack.c.bf16 %v1449, %v1448
    %v1457 = vpack.c.bf16 %v1453, %v1452
    %v1458 = vpack.c.bf16 %v1451, %v1450
    %v1459 = vpack.c.bf16 %v1455, %v1454
    %v1460 = vld [vmem:[%s4] sm:$0xf]
    %v1461 = vld [vmem:[%s4 + $0x4] sm:$0xf]
    %v1462 = vld [vmem:[%s4 + $0x8] sm:$0xf]
    %v1463 = vld [vmem:[%s4 + $0xc] sm:$0xf]
    %v1464 = vld [vmem:[%s4 + $0x10] sm:$0xf]
    %v1465 = vld [vmem:[%s4 + $0x14] sm:$0xf]
    %v1466 = vld [vmem:[%s4 + $0x18] sm:$0xf]
    %v1467 = vld [vmem:[%s4 + $0x1c] sm:$0xf]
    %v1468 = vld [vmem:[%s4 + $0x20] sm:$0xf]
    %v1469 = vld [vmem:[%s4 + $0x24] sm:$0xf]
    %v1470 = vld [vmem:[%s4 + $0x28] sm:$0xf]
    %v1471 = vld [vmem:[%s4 + $0x2c] sm:$0xf]
    %v1472 = vld [vmem:[%s4 + $0x30] sm:$0xf]
    %v1473 = vld [vmem:[%s4 + $0x34] sm:$0xf]
    %v1474 = vld [vmem:[%s4 + $0x38] sm:$0xf]
    %v1475 = vld [vmem:[%s4 + $0x3c] sm:$0xf]
    %v1476 = vld [vmem:[%s4 + $0x40] sm:$0xf]
    %v1477 = vld [vmem:[%s4 + $0x44] sm:$0xf]
    %v1478 = vld [vmem:[%s4 + $0x48] sm:$0xf]
    %v1479 = vld [vmem:[%s4 + $0x4c] sm:$0xf]
    %v1480 = vld [vmem:[%s4 + $0x50] sm:$0xf]
    %v1481 = vld [vmem:[%s4 + $0x54] sm:$0xf]
    %v1482 = vld [vmem:[%s4 + $0x58] sm:$0xf]
    %v1483 = vld [vmem:[%s4 + $0x5c] sm:$0xf]
    %v1484 = vld [vmem:[%s5] sm:$0x1]
    %v1486 = vperm.slane %v1484, 0
    %v1512 = vunpack.c.l.b16 %v1460
    %v1513 = vunpack.c.l.b16 %v1461
    %v1514 = vunpack.c.l.b16 %v1462
    %v1515 = vunpack.c.l.b16 %v1463
    %v1516 = vunpack.c.l.b16 %v1464
    %v1517 = vunpack.c.l.b16 %v1465
    %v1518 = vunpack.c.l.b16 %v1466
    %v1519 = vunpack.c.l.b16 %v1467
    %v1520 = vunpack.c.l.b16 %v1468
    %v1521 = vunpack.c.l.b16 %v1469
    %v1522 = vunpack.c.l.b16 %v1470
    %v1523 = vunpack.c.l.b16 %v1471
    %v1524 = vunpack.c.l.b16 %v1472
    %v1525 = vunpack.c.l.b16 %v1473
    %v1526 = vunpack.c.l.b16 %v1474
    %v1527 = vunpack.c.l.b16 %v1475
    %v1528 = vunpack.c.l.b16 %v1476
    %v1529 = vunpack.c.l.b16 %v1477
    %v1530 = vunpack.c.l.b16 %v1478
    %v1531 = vunpack.c.l.b16 %v1479
    %v1532 = vunpack.c.l.b16 %v1480
    %v1533 = vunpack.c.l.b16 %v1481
    %v1534 = vunpack.c.l.b16 %v1482
    %v1535 = vunpack.c.l.b16 %v1483
    %v1536 = vpack.c.b16 %v1513, %v1512
    %v1537 = vpack.c.b16 %v1515, %v1514
    %v1538 = vpack.c.b16 %v1517, %v1516
    %v1539 = vpack.c.b16 %v1519, %v1518
    %v1540 = vpack.c.b16 %v1521, %v1520
    %v1541 = vpack.c.b16 %v1523, %v1522
    %v1542 = vpack.c.b16 %v1525, %v1524
    %v1543 = vpack.c.b16 %v1527, %v1526
    %v1544 = vpack.c.b16 %v1529, %v1528
    %v1545 = vpack.c.b16 %v1531, %v1530
    %v1546 = vpack.c.b16 %v1533, %v1532
    %v1547 = vpack.c.b16 %v1535, %v1534
    %v1561 = vsel %vm262, %v1457, 0
    %v1564 = vsel %vm262, %v1459, 0
    %1566 = vmatpush.bf16.msra.mxu0 %v1543
    %1567 = vmatpush.bf16.msra.mxu0 %v1542
    %1568 = vmatpush.bf16.msra.mxu0 %v1541
    %1569 = vmatpush.bf16.msra.mxu0 %v1540
    %1570 = vmatpush.bf16.msra.mxu0 %v1539
    %1571 = vmatpush.bf16.msra.mxu0 %v1538
    %1572 = vmatpush.bf16.msra.mxu0 %v1537
    %1573 = vmatpush.bf16.msra.mxu0 %v1536
    %1574 = vmatmul.bf16.gmra.mxu0 %v1456
    %v1575 = vpop.f32.mrf.mxu0
    %v1576 = vadd.f32 %v1486, %v1575
    %v1577 = vpop.f32.mrf.mxu0
    %v1578 = vadd.f32 %v1486, %v1577
    %1579 = vmatmul.bf16.gmra.mxu0 %v1458
    %v1580 = vpop.f32.mrf.mxu0
    %v1581 = vadd.f32 %v1486, %v1580
    %v1582 = vpop.f32.mrf.mxu0
    %v1583 = vadd.f32 %v1486, %v1582
    %1584 = vdwg.mxu0
    %1585 = vmatpush.bf16.msra.mxu0 0
    %1586 = vmatpush.bf16.msra.mxu0 0
    %1587 = vmatpush.bf16.msra.mxu0 0
    %1588 = vmatpush.bf16.msra.mxu0 0
    %1589 = vmatpush.bf16.msra.mxu0 %v1547
    %1590 = vmatpush.bf16.msra.mxu0 %v1546
    %1591 = vmatpush.bf16.msra.mxu0 %v1545
    %1592 = vmatpush.bf16.msra.mxu0 %v1544
    %1593 = vmatmul.bf16.gmra.mxu0 %v1561
    %v1594 = vpop.f32.mrf.mxu0
    %v1595 = vadd.f32 %v1576, %v1594
    %v1596 = vpop.f32.mrf.mxu0
    %v1597 = vadd.f32 %v1578, %v1596
    %1598 = vmatmul.bf16.gmra.mxu0 %v1564
    %v1599 = vpop.f32.mrf.mxu0
    %v1600 = vadd.f32 %v1581, %v1599
    %v1601 = vpop.f32.mrf.mxu0
    %v1602 = vadd.f32 %v1583, %v1601
    %1603 = vdwg.mxu0
    %v1604 = vmax.f32 %v1595, 0.0
    %v1605 = vmax.f32 %v1597, 0.0
    %v1606 = vmax.f32 %v1600, 0.0
    %v1607 = vmax.f32 %v1602, 0.0
    %v1608 = vsel %vm1336, %v1604, 0.0
    %v1609 = vsel %vm1337, %v1605, 0.0
    %v1610 = vsel %vm1338, %v1606, 0.0
    %v1611 = vsel %vm1339, %v1607, 0.0
    %1612 = vst.msk [vmem:[#allocation2 + $0x8] sm:$0xff] %vm35, %v1608
    %1613 = vst.msk [vmem:[#allocation2 + $0x10] sm:$0xff] %vm35, %v1609
    %1614 = vst.msk [vmem:[#allocation2 + $0x18] sm:$0xff] %vm35, %v1610
    %1615 = vst.msk [vmem:[#allocation2 + $0x20] sm:$0xff] %vm35, %v1611
    %v1616 = vld [vmem:[#allocation2 + $0x6] sm:$0xff]
    %v1617 = vld [vmem:[#allocation2 + $0xe] sm:$0xff]
    %v1618 = vld [vmem:[#allocation2 + $0x16] sm:$0xff]
    %v1619 = vld [vmem:[#allocation2 + $0x1e] sm:$0xff]
    %v1620 = vld [vmem:[#allocation2 + $0x7] sm:$0xff]
    %v1621 = vld [vmem:[#allocation2 + $0xf] sm:$0xff]
    %v1622 = vld [vmem:[#allocation2 + $0x17] sm:$0xff]
    %v1623 = vld [vmem:[#allocation2 + $0x1f] sm:$0xff]
    %v1624 = vld [vmem:[#allocation2 + $0x8] sm:$0xff]
    %v1625 = vld [vmem:[#allocation2 + $0x10] sm:$0xff]
    %v1626 = vld [vmem:[#allocation2 + $0x18] sm:$0xff]
    %v1627 = vld [vmem:[#allocation2 + $0x20] sm:$0xff]
    %v1628 = vld [vmem:[#allocation2 + $0x9] sm:$0xff]
    %v1629 = vld [vmem:[#allocation2 + $0x11] sm:$0xff]
    %v1630 = vld [vmem:[#allocation2 + $0x19] sm:$0xff]
    %v1631 = vld [vmem:[#allocation2 + $0x21] sm:$0xff]
    %v1632 = vld [vmem:[#allocation2 + $0xa] sm:$0xff]
    %v1633 = vld [vmem:[#allocation2 + $0x12] sm:$0xff]
    %v1634 = vld [vmem:[#allocation2 + $0x1a] sm:$0xff]
    %v1635 = vld [vmem:[#allocation2 + $0x22] sm:$0xff]
    %v1636 = vmax.f32 %v1620, %v1624
    %v1637 = vmax.f32 %v1621, %v1625
    %v1638 = vmax.f32 %v1622, %v1626
    %v1639 = vmax.f32 %v1623, %v1627
    %v1640 = vmax.f32 %v1636, %v1628
    %v1641 = vmax.f32 %v1637, %v1629
    %v1642 = vmax.f32 %v1638, %v1630
    %v1643 = vmax.f32 %v1639, %v1631
    %1648 = vrot.lane.b32.xlu0 %v1620, 32
    %v1649 = vpop.permute.xlu0 %1648
    %1650 = vrot.lane.b32.xlu0 %v1621, 32
    %v1651 = vpop.permute.xlu0 %1650
    %1652 = vrot.lane.b32.xlu0 %v1622, 32
    %v1653 = vpop.permute.xlu0 %1652
    %1654 = vrot.lane.b32.xlu0 %v1623, 32
    %v1655 = vpop.permute.xlu0 %1654
    %1664 = vrot.lane.b32.xlu0 %v1624, 64
    %v1665 = vpop.permute.xlu0 %1664
    %1666 = vrot.lane.b32.xlu0 %v1625, 64
    %v1667 = vpop.permute.xlu0 %1666
    %1668 = vrot.lane.b32.xlu0 %v1626, 64
    %v1669 = vpop.permute.xlu0 %1668
    %1670 = vrot.lane.b32.xlu0 %v1627, 64
    %v1671 = vpop.permute.xlu0 %1670
    %1680 = vrot.lane.b32.xlu0 %v1628, 96
    %v1681 = vpop.permute.xlu0 %1680
    %1682 = vrot.lane.b32.xlu0 %v1629, 96
    %v1683 = vpop.permute.xlu0 %1682
    %1684 = vrot.lane.b32.xlu0 %v1630, 96
    %v1685 = vpop.permute.xlu0 %1684
    %1686 = vrot.lane.b32.xlu0 %v1631, 96
    %v1687 = vpop.permute.xlu0 %1686
    %1696 = vrot.lane.b32.xlu0 %v1640, 32
    %v1697 = vpop.permute.xlu0 %1696
    %1698 = vrot.lane.b32.xlu0 %v1641, 32
    %v1699 = vpop.permute.xlu0 %1698
    %1700 = vrot.lane.b32.xlu0 %v1642, 32
    %v1701 = vpop.permute.xlu0 %1700
    %1702 = vrot.lane.b32.xlu0 %v1643, 32
    %v1703 = vpop.permute.xlu0 %1702
    %v1708 = vsel %vm35, %v1616, %v1649
    %v1709 = vsel %vm35, %v1617, %v1651
    %v1710 = vsel %vm35, %v1618, %v1653
    %v1711 = vsel %vm35, %v1619, %v1655
    %v1712 = vsel %vm262, %v1708, %v1665
    %v1713 = vsel %vm262, %v1709, %v1667
    %v1714 = vsel %vm262, %v1710, %v1669
    %v1715 = vsel %vm262, %v1711, %v1671
    %v1716 = vsel %vm267, %v1712, %v1681
    %v1717 = vsel %vm267, %v1713, %v1683
    %v1718 = vsel %vm267, %v1714, %v1685
    %v1719 = vsel %vm267, %v1715, %v1687
    %v1720 = vsel %vm35, %v1632, %v1697
    %v1721 = vsel %vm35, %v1633, %v1699
    %v1722 = vsel %vm35, %v1634, %v1701
    %v1723 = vsel %vm35, %v1635, %v1703
    %v1724 = vpack.c.bf16 %v1717, %v1716
    %v1725 = vpack.c.bf16 %v1721, %v1720
    %v1726 = vpack.c.bf16 %v1719, %v1718
    %v1727 = vpack.c.bf16 %v1723, %v1722
    %v1728 = vld [vmem:[%s4] sm:$0xf]
    %v1729 = vld [vmem:[%s4 + $0x4] sm:$0xf]
    %v1730 = vld [vmem:[%s4 + $0x8] sm:$0xf]
    %v1731 = vld [vmem:[%s4 + $0xc] sm:$0xf]
    %v1732 = vld [vmem:[%s4 + $0x10] sm:$0xf]
    %v1733 = vld [vmem:[%s4 + $0x14] sm:$0xf]
    %v1734 = vld [vmem:[%s4 + $0x18] sm:$0xf]
    %v1735 = vld [vmem:[%s4 + $0x1c] sm:$0xf]
    %v1736 = vld [vmem:[%s4 + $0x20] sm:$0xf]
    %v1737 = vld [vmem:[%s4 + $0x24] sm:$0xf]
    %v1738 = vld [vmem:[%s4 + $0x28] sm:$0xf]
    %v1739 = vld [vmem:[%s4 + $0x2c] sm:$0xf]
    %v1740 = vld [vmem:[%s4 + $0x30] sm:$0xf]
    %v1741 = vld [vmem:[%s4 + $0x34] sm:$0xf]
    %v1742 = vld [vmem:[%s4 + $0x38] sm:$0xf]
    %v1743 = vld [vmem:[%s4 + $0x3c] sm:$0xf]
    %v1744 = vld [vmem:[%s4 + $0x40] sm:$0xf]
    %v1745 = vld [vmem:[%s4 + $0x44] sm:$0xf]
    %v1746 = vld [vmem:[%s4 + $0x48] sm:$0xf]
    %v1747 = vld [vmem:[%s4 + $0x4c] sm:$0xf]
    %v1748 = vld [vmem:[%s4 + $0x50] sm:$0xf]
    %v1749 = vld [vmem:[%s4 + $0x54] sm:$0xf]
    %v1750 = vld [vmem:[%s4 + $0x58] sm:$0xf]
    %v1751 = vld [vmem:[%s4 + $0x5c] sm:$0xf]
    %v1752 = vld [vmem:[%s5] sm:$0x1]
    %v1754 = vperm.slane %v1752, 0
    %v1780 = vunpack.c.l.b16 %v1728
    %v1781 = vunpack.c.l.b16 %v1729
    %v1782 = vunpack.c.l.b16 %v1730
    %v1783 = vunpack.c.l.b16 %v1731
    %v1784 = vunpack.c.l.b16 %v1732
    %v1785 = vunpack.c.l.b16 %v1733
    %v1786 = vunpack.c.l.b16 %v1734
    %v1787 = vunpack.c.l.b16 %v1735
    %v1788 = vunpack.c.l.b16 %v1736
    %v1789 = vunpack.c.l.b16 %v1737
    %v1790 = vunpack.c.l.b16 %v1738
    %v1791 = vunpack.c.l.b16 %v1739
    %v1792 = vunpack.c.l.b16 %v1740
    %v1793 = vunpack.c.l.b16 %v1741
    %v1794 = vunpack.c.l.b16 %v1742
    %v1795 = vunpack.c.l.b16 %v1743
    %v1796 = vunpack.c.l.b16 %v1744
    %v1797 = vunpack.c.l.b16 %v1745
    %v1798 = vunpack.c.l.b16 %v1746
    %v1799 = vunpack.c.l.b16 %v1747
    %v1800 = vunpack.c.l.b16 %v1748
    %v1801 = vunpack.c.l.b16 %v1749
    %v1802 = vunpack.c.l.b16 %v1750
    %v1803 = vunpack.c.l.b16 %v1751
    %v1804 = vpack.c.b16 %v1781, %v1780
    %v1805 = vpack.c.b16 %v1783, %v1782
    %v1806 = vpack.c.b16 %v1785, %v1784
    %v1807 = vpack.c.b16 %v1787, %v1786
    %v1808 = vpack.c.b16 %v1789, %v1788
    %v1809 = vpack.c.b16 %v1791, %v1790
    %v1810 = vpack.c.b16 %v1793, %v1792
    %v1811 = vpack.c.b16 %v1795, %v1794
    %v1812 = vpack.c.b16 %v1797, %v1796
    %v1813 = vpack.c.b16 %v1799, %v1798
    %v1814 = vpack.c.b16 %v1801, %v1800
    %v1815 = vpack.c.b16 %v1803, %v1802
    %v1829 = vsel %vm262, %v1725, 0
    %v1832 = vsel %vm262, %v1727, 0
    %1834 = vmatpush.bf16.msra.mxu0 %v1811
    %1835 = vmatpush.bf16.msra.mxu0 %v1810
    %1836 = vmatpush.bf16.msra.mxu0 %v1809
    %1837 = vmatpush.bf16.msra.mxu0 %v1808
    %1838 = vmatpush.bf16.msra.mxu0 %v1807
    %1839 = vmatpush.bf16.msra.mxu0 %v1806
    %1840 = vmatpush.bf16.msra.mxu0 %v1805
    %1841 = vmatpush.bf16.msra.mxu0 %v1804
    %1842 = vmatmul.bf16.gmra.mxu0 %v1724
    %v1843 = vpop.f32.mrf.mxu0
    %v1844 = vadd.f32 %v1754, %v1843
    %v1845 = vpop.f32.mrf.mxu0
    %v1846 = vadd.f32 %v1754, %v1845
    %1847 = vmatmul.bf16.gmra.mxu0 %v1726
    %v1848 = vpop.f32.mrf.mxu0
    %v1849 = vadd.f32 %v1754, %v1848
    %v1850 = vpop.f32.mrf.mxu0
    %v1851 = vadd.f32 %v1754, %v1850
    %1852 = vdwg.mxu0
    %1853 = vmatpush.bf16.msra.mxu0 0
    %1854 = vmatpush.bf16.msra.mxu0 0
    %1855 = vmatpush.bf16.msra.mxu0 0
    %1856 = vmatpush.bf16.msra.mxu0 0
    %1857 = vmatpush.bf16.msra.mxu0 %v1815
    %1858 = vmatpush.bf16.msra.mxu0 %v1814
    %1859 = vmatpush.bf16.msra.mxu0 %v1813
    %1860 = vmatpush.bf16.msra.mxu0 %v1812
    %1861 = vmatmul.bf16.gmra.mxu0 %v1829
    %v1862 = vpop.f32.mrf.mxu0
    %v1863 = vadd.f32 %v1844, %v1862
    %v1864 = vpop.f32.mrf.mxu0
    %v1865 = vadd.f32 %v1846, %v1864
    %1866 = vmatmul.bf16.gmra.mxu0 %v1832
    %v1867 = vpop.f32.mrf.mxu0
    %v1868 = vadd.f32 %v1849, %v1867
    %v1869 = vpop.f32.mrf.mxu0
    %v1870 = vadd.f32 %v1851, %v1869
    %1871 = vdwg.mxu0
    %v1872 = vadd.f32 %v1863, %v1308
    %v1873 = vadd.f32 %v1865, %v1309
    %v1874 = vadd.f32 %v1868, %v1310
    %v1875 = vadd.f32 %v1870, %v1311
    %v1876 = vsel %vm1336, %v1872, 0.0
    %v1877 = vsel %vm1337, %v1873, 0.0
    %v1878 = vsel %vm1338, %v1874, 0.0
    %v1879 = vsel %vm1339, %v1875, 0.0
    %1880 = vst.msk [vmem:[#allocation2 + $0x8] sm:$0xff] %vm35, %v1876
    %1881 = vst.msk [vmem:[#allocation2 + $0x10] sm:$0xff] %vm35, %v1877
    %1882 = vst.msk [vmem:[#allocation2 + $0x18] sm:$0xff] %vm35, %v1878
    %1883 = vst.msk [vmem:[#allocation2 + $0x20] sm:$0xff] %vm35, %v1879
    %v1884 = vld [vmem:[%s700] ss:$2 sm:$0x1]
    %v1885 = vld [vmem:[%s702] ss:$2 sm:$0x1]
    %v1886 = vld [vmem:[%s704] ss:$2 sm:$0x1]
    %v1887 = vmax.f32 %v1884, %v1885
    %v1888 = vmax.f32 %v1887, %v1886
    %vm1889 = vcmask 253952
    %1890 = vst.msk [vmem:[#allocation3] sm:$0x1] %vm1889, %v1888
    %v1891 = vld [vmem:[%s710] ss:$2 sm:$0x1]
    %v1892 = vld [vmem:[%s712] ss:$2 sm:$0x1]
    %v1893 = vld [vmem:[%s714] ss:$2 sm:$0x1]
    %v1894 = vmax.f32 %v1891, %v1892
    %v1895 = vmax.f32 %v1894, %v1893
    %1896 = vst.msk [vmem:[#allocation3 + $0x10] sm:$0x1] %vm1889, %v1895
    %v1897 = vld [vmem:[#allocation3] sm:$0xff]
    %v1898 = vld [vmem:[#allocation3 + $0x8] sm:$0xff]
    %v1899 = vld [vmem:[#allocation3 + $0x10] sm:$0xff]
    %v1900 = vld [vmem:[#allocation3 + $0x18] sm:$0xff]
    %vm1901 = vcmp.lt.s32.totalorder %v31, 1
    %vm1902 = vcmp.lt.s32.totalorder %v32, 1
    %vm1903 = vcmp.lt.s32.totalorder %v33, 1
    %vm1904 = vcmp.lt.s32.totalorder %v34, 1
    %v1905 = vmax.f32 %v1897, 0.0
    %v1906 = vmax.f32 %v1898, 0.0
    %v1907 = vmax.f32 %v1899, 0.0
    %v1908 = vmax.f32 %v1900, 0.0
    %v1909 = vsel %vm1901, 1, 0
    %v1910 = vsel %vm1902, 1, 0
    %v1911 = vsel %vm1903, 1, 0
    %v1912 = vsel %vm1904, 1, 0
    %1913 = vset.pattern.permute.xlu0 0
    %1914 = vperm.xlu0 %1913, %v1909
    %v1915 = vpop.permute.xlu0 %1914
    %1916 = vset.pattern.permute.xlu0 0
    %1917 = vperm.xlu0 %1916, %v1910
    %v1918 = vpop.permute.xlu0 %1917
    %1919 = vset.pattern.permute.xlu0 0
    %1920 = vperm.xlu0 %1919, %v1911
    %v1921 = vpop.permute.xlu0 %1920
    %1922 = vset.pattern.permute.xlu0 0
    %1923 = vperm.xlu0 %1922, %v1912
    %v1924 = vpop.permute.xlu0 %1923
    %vm1925 = vcmp.eq.s32.totalorder %v1915, 1
    %vm1926 = vcmp.eq.s32.totalorder %v1918, 1
    %vm1927 = vcmp.eq.s32.totalorder %v1921, 1
    %vm1928 = vcmp.eq.s32.totalorder %v1924, 1
    %v1929 = vsel %vm1925, %v1905, 0.0
    %v1930 = vsel %vm1926, %v1906, 0.0
    %v1931 = vsel %vm1927, %v1907, 0.0
    %v1932 = vsel %vm1928, %v1908, 0.0
    %1933 = vst.msk [vmem:[#allocation2 + $0x8] sm:$0xff] %vm35, %v1929
    %1934 = vst.msk [vmem:[#allocation2 + $0x10] sm:$0xff] %vm35, %v1930
    %1935 = vst.msk [vmem:[#allocation2 + $0x18] sm:$0xff] %vm35, %v1931
    %1936 = vst.msk [vmem:[#allocation2 + $0x20] sm:$0xff] %vm35, %v1932
    %v1937 = vld [vmem:[#allocation2 + $0x6] sm:$0xff]
    %v1938 = vld [vmem:[#allocation2 + $0xe] sm:$0xff]
    %v1939 = vld [vmem:[#allocation2 + $0x16] sm:$0xff]
    %v1940 = vld [vmem:[#allocation2 + $0x1e] sm:$0xff]
    %v1941 = vld [vmem:[#allocation2 + $0x7] sm:$0xff]
    %v1942 = vld [vmem:[#allocation2 + $0xf] sm:$0xff]
    %v1943 = vld [vmem:[#allocation2 + $0x17] sm:$0xff]
    %v1944 = vld [vmem:[#allocation2 + $0x1f] sm:$0xff]
    %v1945 = vld [vmem:[#allocation2 + $0x8] sm:$0xff]
    %v1946 = vld [vmem:[#allocation2 + $0x10] sm:$0xff]
    %v1947 = vld [vmem:[#allocation2 + $0x18] sm:$0xff]
    %v1948 = vld [vmem:[#allocation2 + $0x20] sm:$0xff]
    %v1949 = vld [vmem:[#allocation2 + $0x9] sm:$0xff]
    %v1950 = vld [vmem:[#allocation2 + $0x11] sm:$0xff]
    %v1951 = vld [vmem:[#allocation2 + $0x19] sm:$0xff]
    %v1952 = vld [vmem:[#allocation2 + $0x21] sm:$0xff]
    %v1953 = vld [vmem:[#allocation2 + $0xa] sm:$0xff]
    %v1954 = vld [vmem:[#allocation2 + $0x12] sm:$0xff]
    %v1955 = vld [vmem:[#allocation2 + $0x1a] sm:$0xff]
    %v1956 = vld [vmem:[#allocation2 + $0x22] sm:$0xff]
    %v1957 = vmax.f32 %v1941, %v1945
    %v1958 = vmax.f32 %v1942, %v1946
    %v1959 = vmax.f32 %v1943, %v1947
    %v1960 = vmax.f32 %v1944, %v1948
    %v1961 = vmax.f32 %v1957, %v1949
    %v1962 = vmax.f32 %v1958, %v1950
    %v1963 = vmax.f32 %v1959, %v1951
    %v1964 = vmax.f32 %v1960, %v1952
    %1969 = vrot.lane.b32.xlu0 %v1941, 32
    %v1970 = vpop.permute.xlu0 %1969
    %1971 = vrot.lane.b32.xlu0 %v1942, 32
    %v1972 = vpop.permute.xlu0 %1971
    %1973 = vrot.lane.b32.xlu0 %v1943, 32
    %v1974 = vpop.permute.xlu0 %1973
    %1975 = vrot.lane.b32.xlu0 %v1944, 32
    %v1976 = vpop.permute.xlu0 %1975
    %1985 = vrot.lane.b32.xlu0 %v1945, 64
    %v1986 = vpop.permute.xlu0 %1985
    %1987 = vrot.lane.b32.xlu0 %v1946, 64
    %v1988 = vpop.permute.xlu0 %1987
    %1989 = vrot.lane.b32.xlu0 %v1947, 64
    %v1990 = vpop.permute.xlu0 %1989
    %1991 = vrot.lane.b32.xlu0 %v1948, 64
    %v1992 = vpop.permute.xlu0 %1991
    %2001 = vrot.lane.b32.xlu0 %v1949, 96
    %v2002 = vpop.permute.xlu0 %2001
    %2003 = vrot.lane.b32.xlu0 %v1950, 96
    %v2004 = vpop.permute.xlu0 %2003
    %2005 = vrot.lane.b32.xlu0 %v1951, 96
    %v2006 = vpop.permute.xlu0 %2005
    %2007 = vrot.lane.b32.xlu0 %v1952, 96
    %v2008 = vpop.permute.xlu0 %2007
    %2017 = vrot.lane.b32.xlu0 %v1961, 32
    %v2018 = vpop.permute.xlu0 %2017
    %2019 = vrot.lane.b32.xlu0 %v1962, 32
    %v2020 = vpop.permute.xlu0 %2019
    %2021 = vrot.lane.b32.xlu0 %v1963, 32
    %v2022 = vpop.permute.xlu0 %2021
    %2023 = vrot.lane.b32.xlu0 %v1964, 32
    %v2024 = vpop.permute.xlu0 %2023
    %v2029 = vsel %vm35, %v1937, %v1970
    %v2030 = vsel %vm35, %v1938, %v1972
    %v2031 = vsel %vm35, %v1939, %v1974
    %v2032 = vsel %vm35, %v1940, %v1976
    %v2033 = vsel %vm262, %v2029, %v1986
    %v2034 = vsel %vm262, %v2030, %v1988
    %v2035 = vsel %vm262, %v2031, %v1990
    %v2036 = vsel %vm262, %v2032, %v1992
    %v2037 = vsel %vm267, %v2033, %v2002
    %v2038 = vsel %vm267, %v2034, %v2004
    %v2039 = vsel %vm267, %v2035, %v2006
    %v2040 = vsel %vm267, %v2036, %v2008
    %v2041 = vsel %vm35, %v1953, %v2018
    %v2042 = vsel %vm35, %v1954, %v2020
    %v2043 = vsel %vm35, %v1955, %v2022
    %v2044 = vsel %vm35, %v1956, %v2024
    %v2045 = vpack.c.bf16 %v2038, %v2037
    %v2046 = vpack.c.bf16 %v2042, %v2041
    %v2047 = vpack.c.bf16 %v2040, %v2039
    %v2048 = vpack.c.bf16 %v2044, %v2043
    %v2049 = vld [vmem:[%s4] sm:$0xf]
    %v2050 = vld [vmem:[%s4 + $0x4] sm:$0xf]
    %v2051 = vld [vmem:[%s4 + $0x8] sm:$0xf]
    %v2052 = vld [vmem:[%s4 + $0xc] sm:$0xf]
    %v2053 = vld [vmem:[%s4 + $0x10] sm:$0xf]
    %v2054 = vld [vmem:[%s4 + $0x14] sm:$0xf]
    %v2055 = vld [vmem:[%s4 + $0x18] sm:$0xf]
    %v2056 = vld [vmem:[%s4 + $0x1c] sm:$0xf]
    %v2057 = vld [vmem:[%s4 + $0x20] sm:$0xf]
    %v2058 = vld [vmem:[%s4 + $0x24] sm:$0xf]
    %v2059 = vld [vmem:[%s4 + $0x28] sm:$0xf]
    %v2060 = vld [vmem:[%s4 + $0x2c] sm:$0xf]
    %v2061 = vld [vmem:[%s4 + $0x30] sm:$0xf]
    %v2062 = vld [vmem:[%s4 + $0x34] sm:$0xf]
    %v2063 = vld [vmem:[%s4 + $0x38] sm:$0xf]
    %v2064 = vld [vmem:[%s4 + $0x3c] sm:$0xf]
    %v2065 = vld [vmem:[%s4 + $0x40] sm:$0xf]
    %v2066 = vld [vmem:[%s4 + $0x44] sm:$0xf]
    %v2067 = vld [vmem:[%s4 + $0x48] sm:$0xf]
    %v2068 = vld [vmem:[%s4 + $0x4c] sm:$0xf]
    %v2069 = vld [vmem:[%s4 + $0x50] sm:$0xf]
    %v2070 = vld [vmem:[%s4 + $0x54] sm:$0xf]
    %v2071 = vld [vmem:[%s4 + $0x58] sm:$0xf]
    %v2072 = vld [vmem:[%s4 + $0x5c] sm:$0xf]
    %v2073 = vld [vmem:[%s5] sm:$0x1]
    %v2075 = vperm.slane %v2073, 0
    %v2101 = vunpack.c.l.b16 %v2049
    %v2102 = vunpack.c.l.b16 %v2050
    %v2103 = vunpack.c.l.b16 %v2051
    %v2104 = vunpack.c.l.b16 %v2052
    %v2105 = vunpack.c.l.b16 %v2053
    %v2106 = vunpack.c.l.b16 %v2054
    %v2107 = vunpack.c.l.b16 %v2055
    %v2108 = vunpack.c.l.b16 %v2056
    %v2109 = vunpack.c.l.b16 %v2057
    %v2110 = vunpack.c.l.b16 %v2058
    %v2111 = vunpack.c.l.b16 %v2059
    %v2112 = vunpack.c.l.b16 %v2060
    %v2113 = vunpack.c.l.b16 %v2061
    %v2114 = vunpack.c.l.b16 %v2062
    %v2115 = vunpack.c.l.b16 %v2063
    %v2116 = vunpack.c.l.b16 %v2064
    %v2117 = vunpack.c.l.b16 %v2065
    %v2118 = vunpack.c.l.b16 %v2066
    %v2119 = vunpack.c.l.b16 %v2067
    %v2120 = vunpack.c.l.b16 %v2068
    %v2121 = vunpack.c.l.b16 %v2069
    %v2122 = vunpack.c.l.b16 %v2070
    %v2123 = vunpack.c.l.b16 %v2071
    %v2124 = vunpack.c.l.b16 %v2072
    %v2125 = vpack.c.b16 %v2102, %v2101
    %v2126 = vpack.c.b16 %v2104, %v2103
    %v2127 = vpack.c.b16 %v2106, %v2105
    %v2128 = vpack.c.b16 %v2108, %v2107
    %v2129 = vpack.c.b16 %v2110, %v2109
    %v2130 = vpack.c.b16 %v2112, %v2111
    %v2131 = vpack.c.b16 %v2114, %v2113
    %v2132 = vpack.c.b16 %v2116, %v2115
    %v2133 = vpack.c.b16 %v2118, %v2117
    %v2134 = vpack.c.b16 %v2120, %v2119
    %v2135 = vpack.c.b16 %v2122, %v2121
    %v2136 = vpack.c.b16 %v2124, %v2123
    %v2150 = vsel %vm262, %v2046, 0
    %v2153 = vsel %vm262, %v2048, 0
    %2155 = vmatpush.bf16.msra.mxu0 %v2132
    %2156 = vmatpush.bf16.msra.mxu0 %v2131
    %2157 = vmatpush.bf16.msra.mxu0 %v2130
    %2158 = vmatpush.bf16.msra.mxu0 %v2129
    %2159 = vmatpush.bf16.msra.mxu0 %v2128
    %2160 = vmatpush.bf16.msra.mxu0 %v2127
    %2161 = vmatpush.bf16.msra.mxu0 %v2126
    %2162 = vmatpush.bf16.msra.mxu0 %v2125
    %2163 = vmatmul.bf16.gmra.mxu0 %v2045
    %v2164 = vpop.f32.mrf.mxu0
    %v2165 = vadd.f32 %v2075, %v2164
    %v2166 = vpop.f32.mrf.mxu0
    %v2167 = vadd.f32 %v2075, %v2166
    %2168 = vmatmul.bf16.gmra.mxu0 %v2047
    %v2169 = vpop.f32.mrf.mxu0
    %v2170 = vadd.f32 %v2075, %v2169
    %v2171 = vpop.f32.mrf.mxu0
    %v2172 = vadd.f32 %v2075, %v2171
    %2173 = vdwg.mxu0
    %2174 = vmatpush.bf16.msra.mxu0 0
    %2175 = vmatpush.bf16.msra.mxu0 0
    %2176 = vmatpush.bf16.msra.mxu0 0
    %2177 = vmatpush.bf16.msra.mxu0 0
    %2178 = vmatpush.bf16.msra.mxu0 %v2136
    %2179 = vmatpush.bf16.msra.mxu0 %v2135
    %2180 = vmatpush.bf16.msra.mxu0 %v2134
    %2181 = vmatpush.bf16.msra.mxu0 %v2133
    %2182 = vmatmul.bf16.gmra.mxu0 %v2150
    %v2183 = vpop.f32.mrf.mxu0
    %v2184 = vadd.f32 %v2165, %v2183
    %v2185 = vpop.f32.mrf.mxu0
    %v2186 = vadd.f32 %v2167, %v2185
    %2187 = vmatmul.bf16.gmra.mxu0 %v2153
    %v2188 = vpop.f32.mrf.mxu0
    %v2189 = vadd.f32 %v2170, %v2188
    %v2190 = vpop.f32.mrf.mxu0
    %v2191 = vadd.f32 %v2172, %v2190
    %2192 = vdwg.mxu0
    %v2193 = vmax.f32 %v2184, 0.0
    %v2194 = vmax.f32 %v2186, 0.0
    %v2195 = vmax.f32 %v2189, 0.0
    %v2196 = vmax.f32 %v2191, 0.0
    %v2197 = vsel %vm1925, %v2193, 0.0
    %v2198 = vsel %vm1926, %v2194, 0.0
    %v2199 = vsel %vm1927, %v2195, 0.0
    %v2200 = vsel %vm1928, %v2196, 0.0
    %2201 = vst.msk [vmem:[#allocation2 + $0x8] sm:$0xff] %vm35, %v2197
    %2202 = vst.msk [vmem:[#allocation2 + $0x10] sm:$0xff] %vm35, %v2198
    %2203 = vst.msk [vmem:[#allocation2 + $0x18] sm:$0xff] %vm35, %v2199
    %2204 = vst.msk [vmem:[#allocation2 + $0x20] sm:$0xff] %vm35, %v2200
    %v2205 = vld [vmem:[#allocation2 + $0x6] sm:$0xff]
    %v2206 = vld [vmem:[#allocation2 + $0xe] sm:$0xff]
    %v2207 = vld [vmem:[#allocation2 + $0x16] sm:$0xff]
    %v2208 = vld [vmem:[#allocation2 + $0x1e] sm:$0xff]
    %v2209 = vld [vmem:[#allocation2 + $0x7] sm:$0xff]
    %v2210 = vld [vmem:[#allocation2 + $0xf] sm:$0xff]
    %v2211 = vld [vmem:[#allocation2 + $0x17] sm:$0xff]
    %v2212 = vld [vmem:[#allocation2 + $0x1f] sm:$0xff]
    %v2213 = vld [vmem:[#allocation2 + $0x8] sm:$0xff]
    %v2214 = vld [vmem:[#allocation2 + $0x10] sm:$0xff]
    %v2215 = vld [vmem:[#allocation2 + $0x18] sm:$0xff]
    %v2216 = vld [vmem:[#allocation2 + $0x20] sm:$0xff]
    %v2217 = vld [vmem:[#allocation2 + $0x9] sm:$0xff]
    %v2218 = vld [vmem:[#allocation2 + $0x11] sm:$0xff]
    %v2219 = vld [vmem:[#allocation2 + $0x19] sm:$0xff]
    %v2220 = vld [vmem:[#allocation2 + $0x21] sm:$0xff]
    %v2221 = vld [vmem:[#allocation2 + $0xa] sm:$0xff]
    %v2222 = vld [vmem:[#allocation2 + $0x12] sm:$0xff]
    %v2223 = vld [vmem:[#allocation2 + $0x1a] sm:$0xff]
    %v2224 = vld [vmem:[#allocation2 + $0x22] sm:$0xff]
    %v2225 = vmax.f32 %v2209, %v2213
    %v2226 = vmax.f32 %v2210, %v2214
    %v2227 = vmax.f32 %v2211, %v2215
    %v2228 = vmax.f32 %v2212, %v2216
    %v2229 = vmax.f32 %v2225, %v2217
    %v2230 = vmax.f32 %v2226, %v2218
    %v2231 = vmax.f32 %v2227, %v2219
    %v2232 = vmax.f32 %v2228, %v2220
    %2237 = vrot.lane.b32.xlu0 %v2209, 32
    %v2238 = vpop.permute.xlu0 %2237
    %2239 = vrot.lane.b32.xlu0 %v2210, 32
    %v2240 = vpop.permute.xlu0 %2239
    %2241 = vrot.lane.b32.xlu0 %v2211, 32
    %v2242 = vpop.permute.xlu0 %2241
    %2243 = vrot.lane.b32.xlu0 %v2212, 32
    %v2244 = vpop.permute.xlu0 %2243
    %2253 = vrot.lane.b32.xlu0 %v2213, 64
    %v2254 = vpop.permute.xlu0 %2253
    %2255 = vrot.lane.b32.xlu0 %v2214, 64
    %v2256 = vpop.permute.xlu0 %2255
    %2257 = vrot.lane.b32.xlu0 %v2215, 64
    %v2258 = vpop.permute.xlu0 %2257
    %2259 = vrot.lane.b32.xlu0 %v2216, 64
    %v2260 = vpop.permute.xlu0 %2259
    %2269 = vrot.lane.b32.xlu0 %v2217, 96
    %v2270 = vpop.permute.xlu0 %2269
    %2271 = vrot.lane.b32.xlu0 %v2218, 96
    %v2272 = vpop.permute.xlu0 %2271
    %2273 = vrot.lane.b32.xlu0 %v2219, 96
    %v2274 = vpop.permute.xlu0 %2273
    %2275 = vrot.lane.b32.xlu0 %v2220, 96
    %v2276 = vpop.permute.xlu0 %2275
    %2285 = vrot.lane.b32.xlu0 %v2229, 32
    %v2286 = vpop.permute.xlu0 %2285
    %2287 = vrot.lane.b32.xlu0 %v2230, 32
    %v2288 = vpop.permute.xlu0 %2287
    %2289 = vrot.lane.b32.xlu0 %v2231, 32
    %v2290 = vpop.permute.xlu0 %2289
    %2291 = vrot.lane.b32.xlu0 %v2232, 32
    %v2292 = vpop.permute.xlu0 %2291
    %v2297 = vsel %vm35, %v2205, %v2238
    %v2298 = vsel %vm35, %v2206, %v2240
    %v2299 = vsel %vm35, %v2207, %v2242
    %v2300 = vsel %vm35, %v2208, %v2244
    %v2301 = vsel %vm262, %v2297, %v2254
    %v2302 = vsel %vm262, %v2298, %v2256
    %v2303 = vsel %vm262, %v2299, %v2258
    %v2304 = vsel %vm262, %v2300, %v2260
    %v2305 = vsel %vm267, %v2301, %v2270
    %v2306 = vsel %vm267, %v2302, %v2272
    %v2307 = vsel %vm267, %v2303, %v2274
    %v2308 = vsel %vm267, %v2304, %v2276
    %v2309 = vsel %vm35, %v2221, %v2286
    %v2310 = vsel %vm35, %v2222, %v2288
    %v2311 = vsel %vm35, %v2223, %v2290
    %v2312 = vsel %vm35, %v2224, %v2292
    %v2313 = vpack.c.bf16 %v2306, %v2305
    %v2314 = vpack.c.bf16 %v2310, %v2309
    %v2315 = vpack.c.bf16 %v2308, %v2307
    %v2316 = vpack.c.bf16 %v2312, %v2311
    %v2317 = vld [vmem:[%s4] sm:$0xf]
    %v2318 = vld [vmem:[%s4 + $0x4] sm:$0xf]
    %v2319 = vld [vmem:[%s4 + $0x8] sm:$0xf]
    %v2320 = vld [vmem:[%s4 + $0xc] sm:$0xf]
    %v2321 = vld [vmem:[%s4 + $0x10] sm:$0xf]
    %v2322 = vld [vmem:[%s4 + $0x14] sm:$0xf]
    %v2323 = vld [vmem:[%s4 + $0x18] sm:$0xf]
    %v2324 = vld [vmem:[%s4 + $0x1c] sm:$0xf]
    %v2325 = vld [vmem:[%s4 + $0x20] sm:$0xf]
    %v2326 = vld [vmem:[%s4 + $0x24] sm:$0xf]
    %v2327 = vld [vmem:[%s4 + $0x28] sm:$0xf]
    %v2328 = vld [vmem:[%s4 + $0x2c] sm:$0xf]
    %v2329 = vld [vmem:[%s4 + $0x30] sm:$0xf]
    %v2330 = vld [vmem:[%s4 + $0x34] sm:$0xf]
    %v2331 = vld [vmem:[%s4 + $0x38] sm:$0xf]
    %v2332 = vld [vmem:[%s4 + $0x3c] sm:$0xf]
    %v2333 = vld [vmem:[%s4 + $0x40] sm:$0xf]
    %v2334 = vld [vmem:[%s4 + $0x44] sm:$0xf]
    %v2335 = vld [vmem:[%s4 + $0x48] sm:$0xf]
    %v2336 = vld [vmem:[%s4 + $0x4c] sm:$0xf]
    %v2337 = vld [vmem:[%s4 + $0x50] sm:$0xf]
    %v2338 = vld [vmem:[%s4 + $0x54] sm:$0xf]
    %v2339 = vld [vmem:[%s4 + $0x58] sm:$0xf]
    %v2340 = vld [vmem:[%s4 + $0x5c] sm:$0xf]
    %v2341 = vld [vmem:[%s5] sm:$0x1]
    %v2343 = vperm.slane %v2341, 0
    %v2369 = vunpack.c.l.b16 %v2317
    %v2370 = vunpack.c.l.b16 %v2318
    %v2371 = vunpack.c.l.b16 %v2319
    %v2372 = vunpack.c.l.b16 %v2320
    %v2373 = vunpack.c.l.b16 %v2321
    %v2374 = vunpack.c.l.b16 %v2322
    %v2375 = vunpack.c.l.b16 %v2323
    %v2376 = vunpack.c.l.b16 %v2324
    %v2377 = vunpack.c.l.b16 %v2325
    %v2378 = vunpack.c.l.b16 %v2326
    %v2379 = vunpack.c.l.b16 %v2327
    %v2380 = vunpack.c.l.b16 %v2328
    %v2381 = vunpack.c.l.b16 %v2329
    %v2382 = vunpack.c.l.b16 %v2330
    %v2383 = vunpack.c.l.b16 %v2331
    %v2384 = vunpack.c.l.b16 %v2332
    %v2385 = vunpack.c.l.b16 %v2333
    %v2386 = vunpack.c.l.b16 %v2334
    %v2387 = vunpack.c.l.b16 %v2335
    %v2388 = vunpack.c.l.b16 %v2336
    %v2389 = vunpack.c.l.b16 %v2337
    %v2390 = vunpack.c.l.b16 %v2338
    %v2391 = vunpack.c.l.b16 %v2339
    %v2392 = vunpack.c.l.b16 %v2340
    %v2393 = vpack.c.b16 %v2370, %v2369
    %v2394 = vpack.c.b16 %v2372, %v2371
    %v2395 = vpack.c.b16 %v2374, %v2373
    %v2396 = vpack.c.b16 %v2376, %v2375
    %v2397 = vpack.c.b16 %v2378, %v2377
    %v2398 = vpack.c.b16 %v2380, %v2379
    %v2399 = vpack.c.b16 %v2382, %v2381
    %v2400 = vpack.c.b16 %v2384, %v2383
    %v2401 = vpack.c.b16 %v2386, %v2385
    %v2402 = vpack.c.b16 %v2388, %v2387
    %v2403 = vpack.c.b16 %v2390, %v2389
    %v2404 = vpack.c.b16 %v2392, %v2391
    %v2418 = vsel %vm262, %v2314, 0
    %v2421 = vsel %vm262, %v2316, 0
    %2423 = vmatpush.bf16.msra.mxu0 %v2400
    %2424 = vmatpush.bf16.msra.mxu0 %v2399
    %2425 = vmatpush.bf16.msra.mxu0 %v2398
    %2426 = vmatpush.bf16.msra.mxu0 %v2397
    %2427 = vmatpush.bf16.msra.mxu0 %v2396
    %2428 = vmatpush.bf16.msra.mxu0 %v2395
    %2429 = vmatpush.bf16.msra.mxu0 %v2394
    %2430 = vmatpush.bf16.msra.mxu0 %v2393
    %2431 = vmatmul.bf16.gmra.mxu0 %v2313
    %v2432 = vpop.f32.mrf.mxu0
    %v2433 = vadd.f32 %v2343, %v2432
    %v2434 = vpop.f32.mrf.mxu0
    %2435 = vmatmul.bf16.gmra.mxu0 %v2315
    %v2436 = vpop.f32.mrf.mxu0
    %v2437 = vadd.f32 %v2343, %v2436
    %v2438 = vpop.f32.mrf.mxu0
    %2439 = vdwg.mxu0
    %2440 = vmatpush.bf16.msra.mxu0 0
    %2441 = vmatpush.bf16.msra.mxu0 0
    %2442 = vmatpush.bf16.msra.mxu0 0
    %2443 = vmatpush.bf16.msra.mxu0 0
    %2444 = vmatpush.bf16.msra.mxu0 %v2404
    %2445 = vmatpush.bf16.msra.mxu0 %v2403
    %2446 = vmatpush.bf16.msra.mxu0 %v2402
    %2447 = vmatpush.bf16.msra.mxu0 %v2401
    %2448 = vmatmul.bf16.gmra.mxu0 %v2418
    %v2449 = vpop.f32.mrf.mxu0
    %v2450 = vadd.f32 %v2433, %v2449
    %v2451 = vpop.f32.mrf.mxu0
    %2452 = vmatmul.bf16.gmra.mxu0 %v2421
    %v2453 = vpop.f32.mrf.mxu0
    %v2454 = vadd.f32 %v2437, %v2453
    %v2455 = vpop.f32.mrf.mxu0
    %2456 = vdwg.mxu0
    %v2457 = vadd.f32 %v2450, %v1897
    %v2458 = vadd.f32 %v2454, %v1899
    %v2460 = vrot.slane %v2458, 7
    %vm2462 = vcmask 1040384
    %v2463 = vsel %vm2462, %v2457, %v2460
    %v2464 = vpack.c.bf16 %v2463, %v2463
    %v2465 = vld [vmem:[%s6] sm:$0xf]
    %v2466 = vld [vmem:[%s6 + $0x4] sm:$0xf]
    %v2467 = vld [vmem:[%s6 + $0x8] sm:$0xf]
    %v2468 = vld [vmem:[%s6 + $0xc] sm:$0xf]
    %v2469 = vld [vmem:[%s7] sm:$0x1]
    %v2471 = vperm.slane %v2469, 0
    %v2477 = vunpack.c.l.b16 %v2465
    %v2478 = vunpack.c.l.b16 %v2466
    %v2479 = vunpack.c.l.b16 %v2467
    %v2480 = vunpack.c.l.b16 %v2468
    %v2481 = vpack.c.b16 %v2478, %v2477
    %v2482 = vpack.c.b16 %v2480, %v2479
    %v2486 = vsel %vm35, %v2464, 0
    %2488 = vmatpush.bf16.msra.mxu0 0
    %2489 = vmatpush.bf16.msra.mxu0 0
    %2490 = vmatpush.bf16.msra.mxu0 0
    %2491 = vmatpush.bf16.msra.mxu0 0
    %2492 = vmatpush.bf16.msra.mxu0 0
    %2493 = vmatpush.bf16.msra.mxu0 0
    %2494 = vmatpush.bf16.msra.mxu0 %v2482
    %2495 = vmatpush.bf16.msra.mxu0 %v2481
    %2496 = vmatmul.bf16.gmra.mxu0 %v2486
    %v2497 = vpop.f32.mrf.mxu0
    %v2498 = vadd.f32 %v2471, %v2497
    %v2499 = vpop.f32.mrf.mxu0
    %2500 = vdwg.mxu0
    %2501 = vst [vmem:[#allocation4] sm:$0x3] %v2498
    // Predicated region
    $region34: #{dpcnn_forward.1} parent=1 // pred_check
      _
    $region35: #{dpcnn_forward.1} parent=1 // pred_check_branch
      %2503 = sbr.rel (0) target = $region37
    $region36: #{dpcnn_forward.1} parent=1 // pred_region
      %2505 = vsyncadd [#allocation5], 0
      %s2507 = sshll.u32 [#allocation4], 4
      %s2508 = int_to_ptr.vmem [resolvable:$true] %s2507
      %s2509 = sshll.u32 %s8, 4
      %s2510 = int_to_ptr.hbm [resolvable:$true] %s2509
      %2512 = dma.vmem_to_hbm [thread:$0]  %s2508, 32, %s2510, [#allocation5]
    $region37: #{dpcnn_forward.1} parent=1 // pred_fallthru
      _
    // Predicated region
    $region38: #{dpcnn_forward.1} parent=1 // pred_check
      _
    $region39: #{dpcnn_forward.1} parent=1 // pred_check_branch
      %2514 = sbr.rel (0) target = $region41
    $region40: #{dpcnn_forward.1} parent=1 // pred_region
      %2516 = dma.done [#allocation5], 32
    $region41: #{dpcnn_forward.1} parent=1 // pred_fallthru
      _
    %2517 = vsyncpa [#allocation5], 1

</llo_original>
